<compile_context>
chip_gen: v7x
topology: tpu7x:2x2x1
jax: 0.10.0
libtpu: 0.0.40
codegen_flags: <defaults>
</compile_context>

<pallas_src>
import functools

import jax
import jax.numpy as jnp
from jax.experimental import pallas as pl
from jax.experimental.pallas import tpu as pltpu


# ----------------------------------------------------------------------------
# Fused DecoderBlock kernel: [conv3x3 + bias + relu] x 2 for one batch element.
# Channels on sublanes, flattened spatial (H*W) on lanes.
# ----------------------------------------------------------------------------
def _decoder_block_kernel(*refs, H, W, has_skip):
    if has_skip:
        (x_ref, skip_ref, w1x_ref, w1s_ref, b1_ref, w2_ref, b2_ref,
         o_ref, h1_ref) = refs
    else:
        (x_ref, w1x_ref, b1_ref, w2_ref, b2_ref, o_ref, h1_ref) = refs
        skip_ref = w1s_ref = None

    HW = H * W
    P = W + 1                      # flat zero halo on each side
    L = HW + 2 * P
    cmid = b1_ref.shape[0]
    cout = b2_ref.shape[0]

    # Edge masks (based on the OUTPUT column w = hw % W): a dx==0 tap must not
    # read the previous row's last pixel at w==0; a dx==2 tap must not read the
    # next row's first pixel at w==W-1.  dx==1 taps never wrap; top/bottom rows
    # are covered by the (W+1)-zero flat halo.
    col = jax.lax.broadcasted_iota(jnp.int32, (1, HW), 1) % W
    edge_mask = {0: col != 0, 1: None, 2: col != (W - 1)}

    def tap(ref, dy, dx):
        s = dy * W + dx            # static lane offset of this tap's window
        if len(ref.shape) == 2:
            p = ref[:, s:s + HW]
        else:
            p = ref[0, :, s:s + HW]
        m = edge_mask[dx]
        if m is None:
            return p
        return jnp.where(m, p, jnp.zeros_like(p))

    # ---- conv1 (BN scale pre-folded into weights) + bias + ReLU ------------
    acc1 = jnp.zeros((cmid, HW), jnp.float32)
    for dy in range(3):
        for dx in range(3):
            t = dy * 3 + dx
            acc1 += jnp.dot(w1x_ref[t], tap(x_ref, dy, dx),
                            preferred_element_type=jnp.float32)
            if has_skip:
                acc1 += jnp.dot(w1s_ref[t], tap(skip_ref, dy, dx),
                                preferred_element_type=jnp.float32)
    h1 = jnp.maximum(acc1 + b1_ref[...], 0.0)            # (Cmid, HW) f32

    # Stage conv1's result in VMEM with the same flat halo so conv2 reuses the
    # shifted-slice trick without any HBM round trip.
    zeros_halo = jnp.zeros((cmid, P), h1_ref.dtype)
    h1_ref[:, 0:P] = zeros_halo
    h1_ref[:, P + HW:L] = zeros_halo
    h1_ref[:, P:P + HW] = h1.astype(h1_ref.dtype)

    # ---- conv2 (BN scale pre-folded into weights) + bias + ReLU ------------
    acc2 = jnp.zeros((cout, HW), jnp.float32)
    for dy in range(3):
        for dx in range(3):
            acc2 += jnp.dot(w2_ref[dy * 3 + dx], tap(h1_ref, dy, dx),
                            preferred_element_type=jnp.float32)
    y2 = jnp.maximum(acc2 + b2_ref[...], 0.0)
    o_ref[0] = y2.astype(o_ref.dtype)


# ----------------------------------------------------------------------------
# Wrapper: one pallas_call per DecoderBlock (grid over batch).
# ----------------------------------------------------------------------------
def _flatten_and_halo_pad(x_nchw):
    """(B, C, H, W) -> (B, C, H*W + 2*(W+1)); spatial flattened onto lanes."""
    B, C, H, W = x_nchw.shape
    flat = x_nchw.reshape(B, C, H * W)
    return jnp.pad(flat, ((0, 0), (0, 0), (W + 1, W + 1)))


def _oihw_to_taps(w_oihw, compute_dtype):
    """PyTorch (Cout, Cin, 3, 3) -> per-tap (9, Cout, Cin), tap index = kh*3+kw."""
    co, ci = w_oihw.shape[0], w_oihw.shape[1]
    return jnp.transpose(w_oihw, (2, 3, 0, 1)).reshape(9, co, ci).astype(compute_dtype)


def decoder_block(x_nchw, skip_nchw, block_params, compute_dtype):
    (w1, b1), (w2, b2) = block_params
    B, Cin, Hin, Win = x_nchw.shape
    H, W = 2 * Hin, 2 * Win
    HW, P = H * W, W + 1
    L = HW + 2 * P
    Cmid, Cout = b1.shape[0], b2.shape[0]
    has_skip = skip_nchw is not None
    Cskip = skip_nchw.shape[1] if has_skip else 0

    # nearest-x2 upsample + flatten + flat halo pad (thin XLA layout glue).
    x_up = jnp.repeat(jnp.repeat(x_nchw, 2, axis=2), 2, axis=3)
    xf = _flatten_and_halo_pad(x_up.astype(compute_dtype))

    w1_taps = _oihw_to_taps(w1, compute_dtype)           # (9, Cmid, Cin+Cskip)
    w2_taps = _oihw_to_taps(w2, compute_dtype)           # (9, Cout, Cmid)
    b1c = b1.reshape(Cmid, 1)                            # f32 epilogue params
    b2c = b2.reshape(Cout, 1)

    inputs = [xf]
    in_specs = [pl.BlockSpec((1, Cin, L), lambda b: (b, 0, 0))]
    if has_skip:
        sf = _flatten_and_halo_pad(skip_nchw.astype(compute_dtype))
        inputs += [sf, w1_taps[:, :, :Cin], w1_taps[:, :, Cin:]]
        in_specs += [
            pl.BlockSpec((1, Cskip, L), lambda b: (b, 0, 0)),
            pl.BlockSpec((9, Cmid, Cin), lambda b: (0, 0, 0)),
            pl.BlockSpec((9, Cmid, Cskip), lambda b: (0, 0, 0)),
        ]
    else:
        inputs += [w1_taps]
        in_specs += [pl.BlockSpec((9, Cmid, Cin), lambda b: (0, 0, 0))]
    inputs += [b1c, w2_taps, b2c]
    in_specs += [
        pl.BlockSpec((Cmid, 1), lambda b: (0, 0)),
        pl.BlockSpec((9, Cout, Cmid), lambda b: (0, 0, 0)),
        pl.BlockSpec((Cout, 1), lambda b: (0, 0)),
    ]

    kernel = functools.partial(_decoder_block_kernel, H=H, W=W, has_skip=has_skip)
    out = pl.pallas_call(
        kernel,
        out_shape=jax.ShapeDtypeStruct((B, Cout, HW), jnp.float32),
        grid_spec=pltpu.PrefetchScalarGridSpec(
            num_scalar_prefetch=0,
            grid=(B,),
            in_specs=in_specs,
            out_specs=pl.BlockSpec((1, Cout, HW), lambda b: (b, 0, 0)),
            scratch_shapes=[pltpu.VMEM((Cmid, L), compute_dtype)],
        ),
        compiler_params=pltpu.CompilerParams(dimension_semantics=("parallel",)),
    )(*inputs)
    return out.reshape(B, Cout, H, W)                    # contiguous, free


def unet_decoder_forward(params, *features_nchw, compute_dtype=jnp.bfloat16):
    # forward(*features): drop the first feature, reverse, head + skips.
    feats = list(features_nchw)[1:][::-1]
    x, skips = feats[0], feats[1:]
    # self.center = nn.Identity()
    for i, block_params in enumerate(params):
        skip = skips[i] if i < len(skips) else None
        x = decoder_block(x, skip, block_params, compute_dtype)
    return x                                             # NCHW, like PyTorch


# ----------------------------------------------------------------------------
# Parameter construction (deterministic, mirrors nn.Module __init__ shapes).
# PyTorch conv weight layout is OIHW; eval-mode BN scale folded into weights.
# ----------------------------------------------------------------------------
def make_conv_bn_params(key, cin, cout):
    kw, kg, kb = jax.random.split(key, 3)
    w = jax.random.normal(kw, (cout, cin, 3, 3), jnp.float32) * 0.1   # OIHW
    gamma = jax.random.uniform(kg, (cout,), jnp.float32, 0.5, 1.5)
    beta = jax.random.normal(kb, (cout,), jnp.float32) * 0.1
    running_mean = jnp.zeros((cout,), jnp.float32)
    running_var = jnp.ones((cout,), jnp.float32)
    scale = gamma / jnp.sqrt(running_var + 1e-5)
    bias = beta - running_mean * scale
    return w * scale[:, None, None, None], bias          # folded weight, bias


def build_unet_decoder_params(key, encoder_channels, decoder_channels):
    enc = list(encoder_channels)[1:][::-1]
    head_channels = enc[0]
    in_channels = [head_channels] + list(decoder_channels[:-1])
    skip_channels = list(enc[1:]) + [0]
    out_channels = list(decoder_channels)
    params = []
    for in_ch, skip_ch, out_ch in zip(in_channels, skip_channels, out_channels):
        key, k1, k2 = jax.random.split(key, 3)
        conv1 = make_conv_bn_params(k1, in_ch + skip_ch, out_ch)
        conv2 = make_conv_bn_params(k2, out_ch, out_ch)
        params.append((conv1, conv2))
    return params


# ----------------------------------------------------------------------------
# Pure-JAX reference (lax conv) for correctness checks.
# ----------------------------------------------------------------------------
def ref_conv3x3_bias_relu(x_nchw, w_oihw, bias, compute_dtype):
    y = jax.lax.conv_general_dilated(
        x_nchw.astype(compute_dtype), w_oihw.astype(compute_dtype),
        window_strides=(1, 1), padding="SAME",
        dimension_numbers=("NCHW", "OIHW", "NCHW"),
        preferred_element_type=jnp.float32)
    return jnp.maximum(y + bias[None, :, None, None], 0.0)


def ref_forward(params, *features_nchw, compute_dtype=jnp.float32):
    feats = list(features_nchw)[1:][::-1]
    x, skips = feats[0], feats[1:]
    for i, ((w1, b1), (w2, b2)) in enumerate(params):
        x = jnp.repeat(jnp.repeat(x, 2, axis=2), 2, axis=3)
        if i < len(skips):
            x = jnp.concatenate([x, skips[i]], axis=1)
        x = ref_conv3x3_bias_relu(x, w1, b1, compute_dtype)
        x = ref_conv3x3_bias_relu(x, w2, b2, compute_dtype)
    return x


if __name__ == "__main__":
    # Small config: n_blocks=3, encoder_channels has 4 entries (input + 3 stages).
    encoder_channels = (3, 8, 16, 32)
    decoder_channels = (16, 8, 4)
    B = 2

    key = jax.random.PRNGKey(0)
    kp, kf = jax.random.split(key)
    params = build_unet_decoder_params(kp, encoder_channels, decoder_channels)

    # Encoder feature pyramid (NCHW, like PyTorch): resolutions 16, 8, 4, 2.
    feat_shapes = [(B, 3, 16, 16), (B, 8, 8, 8), (B, 16, 4, 4), (B, 32, 2, 2)]
    fkeys = jax.random.split(kf, len(feat_shapes))
    features = [jax.random.normal(k, s, jnp.float32)
                for k, s in zip(fkeys, feat_shapes)]

    # Performance path: bf16 MXU operands, f32 accumulation / epilogue.
    out = jax.block_until_ready(
        unet_decoder_forward(params, *features, compute_dtype=jnp.bfloat16))
    expected_shape = (B, decoder_channels[-1], 16, 16)
    assert out.shape == expected_shape, (out.shape, expected_shape)

    # Tight structural check: f32 kernel vs f32 lax-conv reference.
    out_f32 = jax.block_until_ready(
        unet_decoder_forward(params, *features, compute_dtype=jnp.float32))
    ref_f32 = jax.block_until_ready(
        ref_forward(params, *features, compute_dtype=jnp.float32))
    err_f32 = float(jnp.max(jnp.abs(out_f32 - ref_f32)))
    assert jnp.allclose(out_f32, ref_f32, atol=2e-3, rtol=2e-3), err_f32

    # bf16-operand path vs bf16 reference (looser: the bf16 re-quantisation of
    # the staged intermediate is not bit-identical across conv implementations).
    ref_b16 = jax.block_until_ready(
        ref_forward(params, *features, compute_dtype=jnp.bfloat16))
    err_b16 = float(jnp.max(jnp.abs(out - ref_b16)))
    assert jnp.allclose(out, ref_b16, atol=5e-2, rtol=5e-2), err_b16

    print("KERNEL_OK")
</pallas_src>

<mosaic_0001>
module attributes {stable_mosaic.version = 11 : i64} {
  func.func @_decoder_block_kernel(%arg0: i32, %arg1: memref<1x32x26xbf16, #tpu.memory_space<vmem>>, %arg2: memref<1x16x26xbf16, #tpu.memory_space<vmem>>, %arg3: memref<9x16x32xbf16, #tpu.memory_space<vmem>>, %arg4: memref<9x16x16xbf16, #tpu.memory_space<vmem>>, %arg5: memref<16x1xf32, #tpu.memory_space<vmem>>, %arg6: memref<9x16x16xbf16, #tpu.memory_space<vmem>>, %arg7: memref<16x1xf32, #tpu.memory_space<vmem>>, %arg8: memref<1x16x16xf32, #tpu.memory_space<vmem>>, %arg9: memref<16x26xbf16, #tpu.memory_space<vmem>>) attributes {dimension_semantics = [#tpu.dimension_semantics<parallel>], iteration_bounds = array<i64: 2>, scalar_prefetch = 0 : i64, scratch_operands = 1 : i64, tpu.core_type = #tpu.core_type<tc>, window_params = [{transform_indices = @transform_0, window_bounds = array<i64: 1, 32, 26>}, {transform_indices = @transform_1, window_bounds = array<i64: 1, 16, 26>}, {pipeline_mode = #tpu.pipeline_mode<synchronous>, transform_indices = @transform_2, window_bounds = array<i64: 9, 16, 32>}, {pipeline_mode = #tpu.pipeline_mode<synchronous>, transform_indices = @transform_3, window_bounds = array<i64: 9, 16, 16>}, {pipeline_mode = #tpu.pipeline_mode<synchronous>, transform_indices = @transform_4, window_bounds = array<i64: 16, 1>}, {pipeline_mode = #tpu.pipeline_mode<synchronous>, transform_indices = @transform_5, window_bounds = array<i64: 9, 16, 16>}, {pipeline_mode = #tpu.pipeline_mode<synchronous>, transform_indices = @transform_6, window_bounds = array<i64: 16, 1>}, {transform_indices = @transform_7, window_bounds = array<i64: 1, 16, 16>}]} {
    %0 = tpu.iota {dimensions = array<i32: 1>} : vector<1x16xi32>
    %c4_i32 = arith.constant 4 : i32
    %c0_i32 = arith.constant 0 : i32
    %1 = arith.cmpi eq, %c4_i32, %c0_i32 : i32
    %c1_i32 = arith.constant 1 : i32
    %2 = arith.select %1, %c1_i32, %c4_i32 : i32
    %3 = vector.broadcast %2 : i32 to vector<1x16xi32>
    %4 = arith.remsi %0, %3 : vector<1x16xi32>
    %c0_i32_0 = arith.constant 0 : i32
    %5 = vector.broadcast %c0_i32_0 : i32 to vector<1x16xi32>
    %6 = arith.cmpi ne, %4, %5 : vector<1x16xi32>
    %c0_i32_1 = arith.constant 0 : i32
    %7 = vector.broadcast %c0_i32_1 : i32 to vector<1x16xi32>
    %8 = arith.cmpi slt, %4, %7 : vector<1x16xi32>
    %c0_i32_2 = arith.constant 0 : i32
    %9 = arith.cmpi slt, %2, %c0_i32_2 : i32
    %10 = vector.broadcast %9 : i1 to vector<1x16xi1>
    %11 = vector.broadcast %10 : vector<1x16xi1> to vector<1x16xi1>
    %12 = arith.xori %8, %11 : vector<1x16xi1>
    %13 = arith.andi %12, %6 : vector<1x16xi1>
    %14 = vector.broadcast %2 : i32 to vector<1x16xi32>
    %15 = arith.addi %4, %14 : vector<1x16xi32>
    %16 = arith.select %13, %15, %4 : vector<1x16xi1>, vector<1x16xi32>
    %c0_i32_3 = arith.constant 0 : i32
    %17 = vector.broadcast %c0_i32_3 : i32 to vector<1x16xi32>
    %18 = arith.cmpi ne, %16, %17 : vector<1x16xi32>
    %c3_i32 = arith.constant 3 : i32
    %19 = vector.broadcast %c3_i32 : i32 to vector<1x16xi32>
    %20 = arith.cmpi ne, %16, %19 : vector<1x16xi32>
    %cst = arith.constant 0.000000e+00 : f32
    %21 = vector.broadcast %cst : f32 to vector<16x16xf32>
    %c0 = arith.constant 0 : index
    %c0_4 = arith.constant 0 : index
    %c0_5 = arith.constant 0 : index
    %22 = vector.load %arg3[%c0, %c0_4, %c0_5] : memref<9x16x32xbf16, #tpu.memory_space<vmem>>, vector<1x16x32xbf16>
    %23 = vector.shape_cast %22 : vector<1x16x32xbf16> to vector<16x32xbf16>
    %c0_6 = arith.constant 0 : index
    %c0_7 = arith.constant 0 : index
    %c0_8 = arith.constant 0 : index
    %24 = vector.load %arg1[%c0_6, %c0_7, %c0_8] : memref<1x32x26xbf16, #tpu.memory_space<vmem>>, vector<1x32x16xbf16>
    %25 = vector.shape_cast %24 : vector<1x32x16xbf16> to vector<32x16xbf16>
    %cst_9 = arith.constant 0.000000e+00 : bf16
    %26 = vector.broadcast %cst_9 : bf16 to vector<32x16xbf16>
    %27 = vector.shape_cast %18 : vector<1x16xi1> to vector<1x16xi1>
    %28 = vector.broadcast %27 : vector<1x16xi1> to vector<32x16xi1>
    %29 = arith.select %28, %25, %26 : vector<32x16xi1>, vector<32x16xbf16>
    %cst_10 = arith.constant dense<0.000000e+00> : vector<16x16xf32>
    %30 = tpu.matmul %23, %29, %cst_10 {dimension_numbers = #tpu.dot_dimension_numbers<[1], [0], [0], [1], [0, 0, 1, 1], [], []>} : vector<16x32xbf16>, vector<32x16xbf16>, vector<16x16xf32> -> vector<16x16xf32>
    %31 = arith.addf %21, %30 : vector<16x16xf32>
    %c0_11 = arith.constant 0 : index
    %c0_12 = arith.constant 0 : index
    %c0_13 = arith.constant 0 : index
    %32 = vector.load %arg4[%c0_11, %c0_12, %c0_13] : memref<9x16x16xbf16, #tpu.memory_space<vmem>>, vector<1x16x16xbf16>
    %33 = vector.shape_cast %32 : vector<1x16x16xbf16> to vector<16x16xbf16>
    %c0_14 = arith.constant 0 : index
    %c0_15 = arith.constant 0 : index
    %c0_16 = arith.constant 0 : index
    %34 = vector.load %arg2[%c0_14, %c0_15, %c0_16] : memref<1x16x26xbf16, #tpu.memory_space<vmem>>, vector<1x16x16xbf16>
    %35 = vector.shape_cast %34 : vector<1x16x16xbf16> to vector<16x16xbf16>
    %cst_17 = arith.constant 0.000000e+00 : bf16
    %36 = vector.broadcast %cst_17 : bf16 to vector<16x16xbf16>
    %37 = vector.shape_cast %18 : vector<1x16xi1> to vector<1x16xi1>
    %38 = vector.broadcast %37 : vector<1x16xi1> to vector<16x16xi1>
    %39 = arith.select %38, %35, %36 : vector<16x16xi1>, vector<16x16xbf16>
    %cst_18 = arith.constant dense<0.000000e+00> : vector<16x16xf32>
    %40 = tpu.matmul %33, %39, %cst_18 {dimension_numbers = #tpu.dot_dimension_numbers<[1], [0], [0], [1], [0, 0, 1, 1], [], []>} : vector<16x16xbf16>, vector<16x16xbf16>, vector<16x16xf32> -> vector<16x16xf32>
    %41 = arith.addf %31, %40 : vector<16x16xf32>
    %c1 = arith.constant 1 : index
    %c0_19 = arith.constant 0 : index
    %c0_20 = arith.constant 0 : index
    %42 = vector.load %arg3[%c1, %c0_19, %c0_20] : memref<9x16x32xbf16, #tpu.memory_space<vmem>>, vector<1x16x32xbf16>
    %43 = vector.shape_cast %42 : vector<1x16x32xbf16> to vector<16x32xbf16>
    %c0_21 = arith.constant 0 : index
    %c0_22 = arith.constant 0 : index
    %c1_23 = arith.constant 1 : index
    %44 = vector.load %arg1[%c0_21, %c0_22, %c1_23] : memref<1x32x26xbf16, #tpu.memory_space<vmem>>, vector<1x32x16xbf16>
    %45 = vector.shape_cast %44 : vector<1x32x16xbf16> to vector<32x16xbf16>
    %cst_24 = arith.constant dense<0.000000e+00> : vector<16x16xf32>
    %46 = tpu.matmul %43, %45, %cst_24 {dimension_numbers = #tpu.dot_dimension_numbers<[1], [0], [0], [1], [0, 0, 1, 1], [], []>} : vector<16x32xbf16>, vector<32x16xbf16>, vector<16x16xf32> -> vector<16x16xf32>
    %47 = arith.addf %41, %46 : vector<16x16xf32>
    %c1_25 = arith.constant 1 : index
    %c0_26 = arith.constant 0 : index
    %c0_27 = arith.constant 0 : index
    %48 = vector.load %arg4[%c1_25, %c0_26, %c0_27] : memref<9x16x16xbf16, #tpu.memory_space<vmem>>, vector<1x16x16xbf16>
    %49 = vector.shape_cast %48 : vector<1x16x16xbf16> to vector<16x16xbf16>
    %c0_28 = arith.constant 0 : index
    %c0_29 = arith.constant 0 : index
    %c1_30 = arith.constant 1 : index
    %50 = vector.load %arg2[%c0_28, %c0_29, %c1_30] : memref<1x16x26xbf16, #tpu.memory_space<vmem>>, vector<1x16x16xbf16>
    %51 = vector.shape_cast %50 : vector<1x16x16xbf16> to vector<16x16xbf16>
    %cst_31 = arith.constant dense<0.000000e+00> : vector<16x16xf32>
    %52 = tpu.matmul %49, %51, %cst_31 {dimension_numbers = #tpu.dot_dimension_numbers<[1], [0], [0], [1], [0, 0, 1, 1], [], []>} : vector<16x16xbf16>, vector<16x16xbf16>, vector<16x16xf32> -> vector<16x16xf32>
    %53 = arith.addf %47, %52 : vector<16x16xf32>
    %c2 = arith.constant 2 : index
    %c0_32 = arith.constant 0 : index
    %c0_33 = arith.constant 0 : index
    %54 = vector.load %arg3[%c2, %c0_32, %c0_33] : memref<9x16x32xbf16, #tpu.memory_space<vmem>>, vector<1x16x32xbf16>
    %55 = vector.shape_cast %54 : vector<1x16x32xbf16> to vector<16x32xbf16>
    %c0_34 = arith.constant 0 : index
    %c0_35 = arith.constant 0 : index
    %c2_36 = arith.constant 2 : index
    %56 = vector.load %arg1[%c0_34, %c0_35, %c2_36] : memref<1x32x26xbf16, #tpu.memory_space<vmem>>, vector<1x32x16xbf16>
    %57 = vector.shape_cast %56 : vector<1x32x16xbf16> to vector<32x16xbf16>
    %cst_37 = arith.constant 0.000000e+00 : bf16
    %58 = vector.broadcast %cst_37 : bf16 to vector<32x16xbf16>
    %59 = vector.shape_cast %20 : vector<1x16xi1> to vector<1x16xi1>
    %60 = vector.broadcast %59 : vector<1x16xi1> to vector<32x16xi1>
    %61 = arith.select %60, %57, %58 : vector<32x16xi1>, vector<32x16xbf16>
    %cst_38 = arith.constant dense<0.000000e+00> : vector<16x16xf32>
    %62 = tpu.matmul %55, %61, %cst_38 {dimension_numbers = #tpu.dot_dimension_numbers<[1], [0], [0], [1], [0, 0, 1, 1], [], []>} : vector<16x32xbf16>, vector<32x16xbf16>, vector<16x16xf32> -> vector<16x16xf32>
    %63 = arith.addf %53, %62 : vector<16x16xf32>
    %c2_39 = arith.constant 2 : index
    %c0_40 = arith.constant 0 : index
    %c0_41 = arith.constant 0 : index
    %64 = vector.load %arg4[%c2_39, %c0_40, %c0_41] : memref<9x16x16xbf16, #tpu.memory_space<vmem>>, vector<1x16x16xbf16>
    %65 = vector.shape_cast %64 : vector<1x16x16xbf16> to vector<16x16xbf16>
    %c0_42 = arith.constant 0 : index
    %c0_43 = arith.constant 0 : index
    %c2_44 = arith.constant 2 : index
    %66 = vector.load %arg2[%c0_42, %c0_43, %c2_44] : memref<1x16x26xbf16, #tpu.memory_space<vmem>>, vector<1x16x16xbf16>
    %67 = vector.shape_cast %66 : vector<1x16x16xbf16> to vector<16x16xbf16>
    %cst_45 = arith.constant 0.000000e+00 : bf16
    %68 = vector.broadcast %cst_45 : bf16 to vector<16x16xbf16>
    %69 = vector.shape_cast %20 : vector<1x16xi1> to vector<1x16xi1>
    %70 = vector.broadcast %69 : vector<1x16xi1> to vector<16x16xi1>
    %71 = arith.select %70, %67, %68 : vector<16x16xi1>, vector<16x16xbf16>
    %cst_46 = arith.constant dense<0.000000e+00> : vector<16x16xf32>
    %72 = tpu.matmul %65, %71, %cst_46 {dimension_numbers = #tpu.dot_dimension_numbers<[1], [0], [0], [1], [0, 0, 1, 1], [], []>} : vector<16x16xbf16>, vector<16x16xbf16>, vector<16x16xf32> -> vector<16x16xf32>
    %73 = arith.addf %63, %72 : vector<16x16xf32>
    %c3 = arith.constant 3 : index
    %c0_47 = arith.constant 0 : index
    %c0_48 = arith.constant 0 : index
    %74 = vector.load %arg3[%c3, %c0_47, %c0_48] : memref<9x16x32xbf16, #tpu.memory_space<vmem>>, vector<1x16x32xbf16>
    %75 = vector.shape_cast %74 : vector<1x16x32xbf16> to vector<16x32xbf16>
    %c0_49 = arith.constant 0 : index
    %c0_50 = arith.constant 0 : index
    %c4 = arith.constant 4 : index
    %76 = vector.load %arg1[%c0_49, %c0_50, %c4] : memref<1x32x26xbf16, #tpu.memory_space<vmem>>, vector<1x32x16xbf16>
    %77 = vector.shape_cast %76 : vector<1x32x16xbf16> to vector<32x16xbf16>
    %cst_51 = arith.constant 0.000000e+00 : bf16
    %78 = vector.broadcast %cst_51 : bf16 to vector<32x16xbf16>
    %79 = vector.shape_cast %18 : vector<1x16xi1> to vector<1x16xi1>
    %80 = vector.broadcast %79 : vector<1x16xi1> to vector<32x16xi1>
    %81 = arith.select %80, %77, %78 : vector<32x16xi1>, vector<32x16xbf16>
    %cst_52 = arith.constant dense<0.000000e+00> : vector<16x16xf32>
    %82 = tpu.matmul %75, %81, %cst_52 {dimension_numbers = #tpu.dot_dimension_numbers<[1], [0], [0], [1], [0, 0, 1, 1], [], []>} : vector<16x32xbf16>, vector<32x16xbf16>, vector<16x16xf32> -> vector<16x16xf32>
    %83 = arith.addf %73, %82 : vector<16x16xf32>
    %c3_53 = arith.constant 3 : index
    %c0_54 = arith.constant 0 : index
    %c0_55 = arith.constant 0 : index
    %84 = vector.load %arg4[%c3_53, %c0_54, %c0_55] : memref<9x16x16xbf16, #tpu.memory_space<vmem>>, vector<1x16x16xbf16>
    %85 = vector.shape_cast %84 : vector<1x16x16xbf16> to vector<16x16xbf16>
    %c0_56 = arith.constant 0 : index
    %c0_57 = arith.constant 0 : index
    %c4_58 = arith.constant 4 : index
    %86 = vector.load %arg2[%c0_56, %c0_57, %c4_58] : memref<1x16x26xbf16, #tpu.memory_space<vmem>>, vector<1x16x16xbf16>
    %87 = vector.shape_cast %86 : vector<1x16x16xbf16> to vector<16x16xbf16>
    %cst_59 = arith.constant 0.000000e+00 : bf16
    %88 = vector.broadcast %cst_59 : bf16 to vector<16x16xbf16>
    %89 = vector.shape_cast %18 : vector<1x16xi1> to vector<1x16xi1>
    %90 = vector.broadcast %89 : vector<1x16xi1> to vector<16x16xi1>
    %91 = arith.select %90, %87, %88 : vector<16x16xi1>, vector<16x16xbf16>
    %cst_60 = arith.constant dense<0.000000e+00> : vector<16x16xf32>
    %92 = tpu.matmul %85, %91, %cst_60 {dimension_numbers = #tpu.dot_dimension_numbers<[1], [0], [0], [1], [0, 0, 1, 1], [], []>} : vector<16x16xbf16>, vector<16x16xbf16>, vector<16x16xf32> -> vector<16x16xf32>
    %93 = arith.addf %83, %92 : vector<16x16xf32>
    %c4_61 = arith.constant 4 : index
    %c0_62 = arith.constant 0 : index
    %c0_63 = arith.constant 0 : index
    %94 = vector.load %arg3[%c4_61, %c0_62, %c0_63] : memref<9x16x32xbf16, #tpu.memory_space<vmem>>, vector<1x16x32xbf16>
    %95 = vector.shape_cast %94 : vector<1x16x32xbf16> to vector<16x32xbf16>
    %c0_64 = arith.constant 0 : index
    %c0_65 = arith.constant 0 : index
    %c5 = arith.constant 5 : index
    %96 = vector.load %arg1[%c0_64, %c0_65, %c5] : memref<1x32x26xbf16, #tpu.memory_space<vmem>>, vector<1x32x16xbf16>
    %97 = vector.shape_cast %96 : vector<1x32x16xbf16> to vector<32x16xbf16>
    %cst_66 = arith.constant dense<0.000000e+00> : vector<16x16xf32>
    %98 = tpu.matmul %95, %97, %cst_66 {dimension_numbers = #tpu.dot_dimension_numbers<[1], [0], [0], [1], [0, 0, 1, 1], [], []>} : vector<16x32xbf16>, vector<32x16xbf16>, vector<16x16xf32> -> vector<16x16xf32>
    %99 = arith.addf %93, %98 : vector<16x16xf32>
    %c4_67 = arith.constant 4 : index
    %c0_68 = arith.constant 0 : index
    %c0_69 = arith.constant 0 : index
    %100 = vector.load %arg4[%c4_67, %c0_68, %c0_69] : memref<9x16x16xbf16, #tpu.memory_space<vmem>>, vector<1x16x16xbf16>
    %101 = vector.shape_cast %100 : vector<1x16x16xbf16> to vector<16x16xbf16>
    %c0_70 = arith.constant 0 : index
    %c0_71 = arith.constant 0 : index
    %c5_72 = arith.constant 5 : index
    %102 = vector.load %arg2[%c0_70, %c0_71, %c5_72] : memref<1x16x26xbf16, #tpu.memory_space<vmem>>, vector<1x16x16xbf16>
    %103 = vector.shape_cast %102 : vector<1x16x16xbf16> to vector<16x16xbf16>
    %cst_73 = arith.constant dense<0.000000e+00> : vector<16x16xf32>
    %104 = tpu.matmul %101, %103, %cst_73 {dimension_numbers = #tpu.dot_dimension_numbers<[1], [0], [0], [1], [0, 0, 1, 1], [], []>} : vector<16x16xbf16>, vector<16x16xbf16>, vector<16x16xf32> -> vector<16x16xf32>
    %105 = arith.addf %99, %104 : vector<16x16xf32>
    %c5_74 = arith.constant 5 : index
    %c0_75 = arith.constant 0 : index
    %c0_76 = arith.constant 0 : index
    %106 = vector.load %arg3[%c5_74, %c0_75, %c0_76] : memref<9x16x32xbf16, #tpu.memory_space<vmem>>, vector<1x16x32xbf16>
    %107 = vector.shape_cast %106 : vector<1x16x32xbf16> to vector<16x32xbf16>
    %c0_77 = arith.constant 0 : index
    %c0_78 = arith.constant 0 : index
    %c6 = arith.constant 6 : index
    %108 = vector.load %arg1[%c0_77, %c0_78, %c6] : memref<1x32x26xbf16, #tpu.memory_space<vmem>>, vector<1x32x16xbf16>
    %109 = vector.shape_cast %108 : vector<1x32x16xbf16> to vector<32x16xbf16>
    %cst_79 = arith.constant 0.000000e+00 : bf16
    %110 = vector.broadcast %cst_79 : bf16 to vector<32x16xbf16>
    %111 = vector.shape_cast %20 : vector<1x16xi1> to vector<1x16xi1>
    %112 = vector.broadcast %111 : vector<1x16xi1> to vector<32x16xi1>
    %113 = arith.select %112, %109, %110 : vector<32x16xi1>, vector<32x16xbf16>
    %cst_80 = arith.constant dense<0.000000e+00> : vector<16x16xf32>
    %114 = tpu.matmul %107, %113, %cst_80 {dimension_numbers = #tpu.dot_dimension_numbers<[1], [0], [0], [1], [0, 0, 1, 1], [], []>} : vector<16x32xbf16>, vector<32x16xbf16>, vector<16x16xf32> -> vector<16x16xf32>
    %115 = arith.addf %105, %114 : vector<16x16xf32>
    %c5_81 = arith.constant 5 : index
    %c0_82 = arith.constant 0 : index
    %c0_83 = arith.constant 0 : index
    %116 = vector.load %arg4[%c5_81, %c0_82, %c0_83] : memref<9x16x16xbf16, #tpu.memory_space<vmem>>, vector<1x16x16xbf16>
    %117 = vector.shape_cast %116 : vector<1x16x16xbf16> to vector<16x16xbf16>
    %c0_84 = arith.constant 0 : index
    %c0_85 = arith.constant 0 : index
    %c6_86 = arith.constant 6 : index
    %118 = vector.load %arg2[%c0_84, %c0_85, %c6_86] : memref<1x16x26xbf16, #tpu.memory_space<vmem>>, vector<1x16x16xbf16>
    %119 = vector.shape_cast %118 : vector<1x16x16xbf16> to vector<16x16xbf16>
    %cst_87 = arith.constant 0.000000e+00 : bf16
    %120 = vector.broadcast %cst_87 : bf16 to vector<16x16xbf16>
    %121 = vector.shape_cast %20 : vector<1x16xi1> to vector<1x16xi1>
    %122 = vector.broadcast %121 : vector<1x16xi1> to vector<16x16xi1>
    %123 = arith.select %122, %119, %120 : vector<16x16xi1>, vector<16x16xbf16>
    %cst_88 = arith.constant dense<0.000000e+00> : vector<16x16xf32>
    %124 = tpu.matmul %117, %123, %cst_88 {dimension_numbers = #tpu.dot_dimension_numbers<[1], [0], [0], [1], [0, 0, 1, 1], [], []>} : vector<16x16xbf16>, vector<16x16xbf16>, vector<16x16xf32> -> vector<16x16xf32>
    %125 = arith.addf %115, %124 : vector<16x16xf32>
    %c6_89 = arith.constant 6 : index
    %c0_90 = arith.constant 0 : index
    %c0_91 = arith.constant 0 : index
    %126 = vector.load %arg3[%c6_89, %c0_90, %c0_91] : memref<9x16x32xbf16, #tpu.memory_space<vmem>>, vector<1x16x32xbf16>
    %127 = vector.shape_cast %126 : vector<1x16x32xbf16> to vector<16x32xbf16>
    %c0_92 = arith.constant 0 : index
    %c0_93 = arith.constant 0 : index
    %c8 = arith.constant 8 : index
    %128 = vector.load %arg1[%c0_92, %c0_93, %c8] : memref<1x32x26xbf16, #tpu.memory_space<vmem>>, vector<1x32x16xbf16>
    %129 = vector.shape_cast %128 : vector<1x32x16xbf16> to vector<32x16xbf16>
    %cst_94 = arith.constant 0.000000e+00 : bf16
    %130 = vector.broadcast %cst_94 : bf16 to vector<32x16xbf16>
    %131 = vector.shape_cast %18 : vector<1x16xi1> to vector<1x16xi1>
    %132 = vector.broadcast %131 : vector<1x16xi1> to vector<32x16xi1>
    %133 = arith.select %132, %129, %130 : vector<32x16xi1>, vector<32x16xbf16>
    %cst_95 = arith.constant dense<0.000000e+00> : vector<16x16xf32>
    %134 = tpu.matmul %127, %133, %cst_95 {dimension_numbers = #tpu.dot_dimension_numbers<[1], [0], [0], [1], [0, 0, 1, 1], [], []>} : vector<16x32xbf16>, vector<32x16xbf16>, vector<16x16xf32> -> vector<16x16xf32>
    %135 = arith.addf %125, %134 : vector<16x16xf32>
    %c6_96 = arith.constant 6 : index
    %c0_97 = arith.constant 0 : index
    %c0_98 = arith.constant 0 : index
    %136 = vector.load %arg4[%c6_96, %c0_97, %c0_98] : memref<9x16x16xbf16, #tpu.memory_space<vmem>>, vector<1x16x16xbf16>
    %137 = vector.shape_cast %136 : vector<1x16x16xbf16> to vector<16x16xbf16>
    %c0_99 = arith.constant 0 : index
    %c0_100 = arith.constant 0 : index
    %c8_101 = arith.constant 8 : index
    %138 = vector.load %arg2[%c0_99, %c0_100, %c8_101] : memref<1x16x26xbf16, #tpu.memory_space<vmem>>, vector<1x16x16xbf16>
    %139 = vector.shape_cast %138 : vector<1x16x16xbf16> to vector<16x16xbf16>
    %cst_102 = arith.constant 0.000000e+00 : bf16
    %140 = vector.broadcast %cst_102 : bf16 to vector<16x16xbf16>
    %141 = vector.shape_cast %18 : vector<1x16xi1> to vector<1x16xi1>
    %142 = vector.broadcast %141 : vector<1x16xi1> to vector<16x16xi1>
    %143 = arith.select %142, %139, %140 : vector<16x16xi1>, vector<16x16xbf16>
    %cst_103 = arith.constant dense<0.000000e+00> : vector<16x16xf32>
    %144 = tpu.matmul %137, %143, %cst_103 {dimension_numbers = #tpu.dot_dimension_numbers<[1], [0], [0], [1], [0, 0, 1, 1], [], []>} : vector<16x16xbf16>, vector<16x16xbf16>, vector<16x16xf32> -> vector<16x16xf32>
    %145 = arith.addf %135, %144 : vector<16x16xf32>
    %c7 = arith.constant 7 : index
    %c0_104 = arith.constant 0 : index
    %c0_105 = arith.constant 0 : index
    %146 = vector.load %arg3[%c7, %c0_104, %c0_105] : memref<9x16x32xbf16, #tpu.memory_space<vmem>>, vector<1x16x32xbf16>
    %147 = vector.shape_cast %146 : vector<1x16x32xbf16> to vector<16x32xbf16>
    %c0_106 = arith.constant 0 : index
    %c0_107 = arith.constant 0 : index
    %c9 = arith.constant 9 : index
    %148 = vector.load %arg1[%c0_106, %c0_107, %c9] : memref<1x32x26xbf16, #tpu.memory_space<vmem>>, vector<1x32x16xbf16>
    %149 = vector.shape_cast %148 : vector<1x32x16xbf16> to vector<32x16xbf16>
    %cst_108 = arith.constant dense<0.000000e+00> : vector<16x16xf32>
    %150 = tpu.matmul %147, %149, %cst_108 {dimension_numbers = #tpu.dot_dimension_numbers<[1], [0], [0], [1], [0, 0, 1, 1], [], []>} : vector<16x32xbf16>, vector<32x16xbf16>, vector<16x16xf32> -> vector<16x16xf32>
    %151 = arith.addf %145, %150 : vector<16x16xf32>
    %c7_109 = arith.constant 7 : index
    %c0_110 = arith.constant 0 : index
    %c0_111 = arith.constant 0 : index
    %152 = vector.load %arg4[%c7_109, %c0_110, %c0_111] : memref<9x16x16xbf16, #tpu.memory_space<vmem>>, vector<1x16x16xbf16>
    %153 = vector.shape_cast %152 : vector<1x16x16xbf16> to vector<16x16xbf16>
    %c0_112 = arith.constant 0 : index
    %c0_113 = arith.constant 0 : index
    %c9_114 = arith.constant 9 : index
    %154 = vector.load %arg2[%c0_112, %c0_113, %c9_114] : memref<1x16x26xbf16, #tpu.memory_space<vmem>>, vector<1x16x16xbf16>
    %155 = vector.shape_cast %154 : vector<1x16x16xbf16> to vector<16x16xbf16>
    %cst_115 = arith.constant dense<0.000000e+00> : vector<16x16xf32>
    %156 = tpu.matmul %153, %155, %cst_115 {dimension_numbers = #tpu.dot_dimension_numbers<[1], [0], [0], [1], [0, 0, 1, 1], [], []>} : vector<16x16xbf16>, vector<16x16xbf16>, vector<16x16xf32> -> vector<16x16xf32>
    %157 = arith.addf %151, %156 : vector<16x16xf32>
    %c8_116 = arith.constant 8 : index
    %c0_117 = arith.constant 0 : index
    %c0_118 = arith.constant 0 : index
    %158 = vector.load %arg3[%c8_116, %c0_117, %c0_118] : memref<9x16x32xbf16, #tpu.memory_space<vmem>>, vector<1x16x32xbf16>
    %159 = vector.shape_cast %158 : vector<1x16x32xbf16> to vector<16x32xbf16>
    %c0_119 = arith.constant 0 : index
    %c0_120 = arith.constant 0 : index
    %c10 = arith.constant 10 : index
    %160 = vector.load %arg1[%c0_119, %c0_120, %c10] : memref<1x32x26xbf16, #tpu.memory_space<vmem>>, vector<1x32x16xbf16>
    %161 = vector.shape_cast %160 : vector<1x32x16xbf16> to vector<32x16xbf16>
    %cst_121 = arith.constant 0.000000e+00 : bf16
    %162 = vector.broadcast %cst_121 : bf16 to vector<32x16xbf16>
    %163 = vector.shape_cast %20 : vector<1x16xi1> to vector<1x16xi1>
    %164 = vector.broadcast %163 : vector<1x16xi1> to vector<32x16xi1>
    %165 = arith.select %164, %161, %162 : vector<32x16xi1>, vector<32x16xbf16>
    %cst_122 = arith.constant dense<0.000000e+00> : vector<16x16xf32>
    %166 = tpu.matmul %159, %165, %cst_122 {dimension_numbers = #tpu.dot_dimension_numbers<[1], [0], [0], [1], [0, 0, 1, 1], [], []>} : vector<16x32xbf16>, vector<32x16xbf16>, vector<16x16xf32> -> vector<16x16xf32>
    %167 = arith.addf %157, %166 : vector<16x16xf32>
    %c8_123 = arith.constant 8 : index
    %c0_124 = arith.constant 0 : index
    %c0_125 = arith.constant 0 : index
    %168 = vector.load %arg4[%c8_123, %c0_124, %c0_125] : memref<9x16x16xbf16, #tpu.memory_space<vmem>>, vector<1x16x16xbf16>
    %169 = vector.shape_cast %168 : vector<1x16x16xbf16> to vector<16x16xbf16>
    %c0_126 = arith.constant 0 : index
    %c0_127 = arith.constant 0 : index
    %c10_128 = arith.constant 10 : index
    %170 = vector.load %arg2[%c0_126, %c0_127, %c10_128] : memref<1x16x26xbf16, #tpu.memory_space<vmem>>, vector<1x16x16xbf16>
    %171 = vector.shape_cast %170 : vector<1x16x16xbf16> to vector<16x16xbf16>
    %cst_129 = arith.constant 0.000000e+00 : bf16
    %172 = vector.broadcast %cst_129 : bf16 to vector<16x16xbf16>
    %173 = vector.shape_cast %20 : vector<1x16xi1> to vector<1x16xi1>
    %174 = vector.broadcast %173 : vector<1x16xi1> to vector<16x16xi1>
    %175 = arith.select %174, %171, %172 : vector<16x16xi1>, vector<16x16xbf16>
    %cst_130 = arith.constant dense<0.000000e+00> : vector<16x16xf32>
    %176 = tpu.matmul %169, %175, %cst_130 {dimension_numbers = #tpu.dot_dimension_numbers<[1], [0], [0], [1], [0, 0, 1, 1], [], []>} : vector<16x16xbf16>, vector<16x16xbf16>, vector<16x16xf32> -> vector<16x16xf32>
    %177 = arith.addf %167, %176 : vector<16x16xf32>
    %c0_131 = arith.constant 0 : index
    %c0_132 = arith.constant 0 : index
    %178 = vector.load %arg5[%c0_131, %c0_132] : memref<16x1xf32, #tpu.memory_space<vmem>>, vector<16x1xf32>
    %179 = vector.broadcast %178 : vector<16x1xf32> to vector<16x16xf32>
    %180 = arith.addf %177, %179 : vector<16x16xf32>
    %cst_133 = arith.constant 0.000000e+00 : f32
    %181 = vector.broadcast %cst_133 : f32 to vector<16x16xf32>
    %182 = arith.maximumf %180, %181 : vector<16x16xf32>
    %cst_134 = arith.constant 0.000000e+00 : bf16
    %183 = vector.broadcast %cst_134 : bf16 to vector<16x5xbf16>
    %c0_135 = arith.constant 0 : index
    %c0_136 = arith.constant 0 : index
    %184 = vector.load %arg9[%c0_135, %c0_136] : memref<16x26xbf16, #tpu.memory_space<vmem>>, vector<16x5xbf16>
    tpu.vector_store %arg9[%c0_135, %c0_136], %183 {strides = array<i32>} : memref<16x26xbf16, #tpu.memory_space<vmem>>, vector<16x5xbf16>,
    %c0_137 = arith.constant 0 : index
    %c21 = arith.constant 21 : index
    %185 = vector.load %arg9[%c0_137, %c21] : memref<16x26xbf16, #tpu.memory_space<vmem>>, vector<16x5xbf16>
    tpu.vector_store %arg9[%c0_137, %c21], %183 {strides = array<i32>} : memref<16x26xbf16, #tpu.memory_space<vmem>>, vector<16x5xbf16>,
    %186 = arith.truncf %182 : vector<16x16xf32> to vector<16x16xbf16>
    %c0_138 = arith.constant 0 : index
    %c5_139 = arith.constant 5 : index
    %187 = vector.load %arg9[%c0_138, %c5_139] : memref<16x26xbf16, #tpu.memory_space<vmem>>, vector<16x16xbf16>
    tpu.vector_store %arg9[%c0_138, %c5_139], %186 {strides = array<i32>} : memref<16x26xbf16, #tpu.memory_space<vmem>>, vector<16x16xbf16>,
    %cst_140 = arith.constant 0.000000e+00 : f32
    %188 = vector.broadcast %cst_140 : f32 to vector<16x16xf32>
    %c0_141 = arith.constant 0 : index
    %c0_142 = arith.constant 0 : index
    %c0_143 = arith.constant 0 : index
    %189 = vector.load %arg6[%c0_141, %c0_142, %c0_143] : memref<9x16x16xbf16, #tpu.memory_space<vmem>>, vector<1x16x16xbf16>
    %190 = vector.shape_cast %189 : vector<1x16x16xbf16> to vector<16x16xbf16>
    %c0_144 = arith.constant 0 : index
    %c0_145 = arith.constant 0 : index
    %191 = vector.load %arg9[%c0_144, %c0_145] : memref<16x26xbf16, #tpu.memory_space<vmem>>, vector<16x16xbf16>
    %cst_146 = arith.constant 0.000000e+00 : bf16
    %192 = vector.broadcast %cst_146 : bf16 to vector<16x16xbf16>
    %193 = vector.shape_cast %18 : vector<1x16xi1> to vector<1x16xi1>
    %194 = vector.broadcast %193 : vector<1x16xi1> to vector<16x16xi1>
    %195 = arith.select %194, %191, %192 : vector<16x16xi1>, vector<16x16xbf16>
    %cst_147 = arith.constant dense<0.000000e+00> : vector<16x16xf32>
    %196 = tpu.matmul %190, %195, %cst_147 {dimension_numbers = #tpu.dot_dimension_numbers<[1], [0], [0], [1], [0, 0, 1, 1], [], []>} : vector<16x16xbf16>, vector<16x16xbf16>, vector<16x16xf32> -> vector<16x16xf32>
    %197 = arith.addf %188, %196 : vector<16x16xf32>
    %c1_148 = arith.constant 1 : index
    %c0_149 = arith.constant 0 : index
    %c0_150 = arith.constant 0 : index
    %198 = vector.load %arg6[%c1_148, %c0_149, %c0_150] : memref<9x16x16xbf16, #tpu.memory_space<vmem>>, vector<1x16x16xbf16>
    %199 = vector.shape_cast %198 : vector<1x16x16xbf16> to vector<16x16xbf16>
    %c0_151 = arith.constant 0 : index
    %c1_152 = arith.constant 1 : index
    %200 = vector.load %arg9[%c0_151, %c1_152] : memref<16x26xbf16, #tpu.memory_space<vmem>>, vector<16x16xbf16>
    %cst_153 = arith.constant dense<0.000000e+00> : vector<16x16xf32>
    %201 = tpu.matmul %199, %200, %cst_153 {dimension_numbers = #tpu.dot_dimension_numbers<[1], [0], [0], [1], [0, 0, 1, 1], [], []>} : vector<16x16xbf16>, vector<16x16xbf16>, vector<16x16xf32> -> vector<16x16xf32>
    %202 = arith.addf %197, %201 : vector<16x16xf32>
    %c2_154 = arith.constant 2 : index
    %c0_155 = arith.constant 0 : index
    %c0_156 = arith.constant 0 : index
    %203 = vector.load %arg6[%c2_154, %c0_155, %c0_156] : memref<9x16x16xbf16, #tpu.memory_space<vmem>>, vector<1x16x16xbf16>
    %204 = vector.shape_cast %203 : vector<1x16x16xbf16> to vector<16x16xbf16>
    %c0_157 = arith.constant 0 : index
    %c2_158 = arith.constant 2 : index
    %205 = vector.load %arg9[%c0_157, %c2_158] : memref<16x26xbf16, #tpu.memory_space<vmem>>, vector<16x16xbf16>
    %cst_159 = arith.constant 0.000000e+00 : bf16
    %206 = vector.broadcast %cst_159 : bf16 to vector<16x16xbf16>
    %207 = vector.shape_cast %20 : vector<1x16xi1> to vector<1x16xi1>
    %208 = vector.broadcast %207 : vector<1x16xi1> to vector<16x16xi1>
    %209 = arith.select %208, %205, %206 : vector<16x16xi1>, vector<16x16xbf16>
    %cst_160 = arith.constant dense<0.000000e+00> : vector<16x16xf32>
    %210 = tpu.matmul %204, %209, %cst_160 {dimension_numbers = #tpu.dot_dimension_numbers<[1], [0], [0], [1], [0, 0, 1, 1], [], []>} : vector<16x16xbf16>, vector<16x16xbf16>, vector<16x16xf32> -> vector<16x16xf32>
    %211 = arith.addf %202, %210 : vector<16x16xf32>
    %c3_161 = arith.constant 3 : index
    %c0_162 = arith.constant 0 : index
    %c0_163 = arith.constant 0 : index
    %212 = vector.load %arg6[%c3_161, %c0_162, %c0_163] : memref<9x16x16xbf16, #tpu.memory_space<vmem>>, vector<1x16x16xbf16>
    %213 = vector.shape_cast %212 : vector<1x16x16xbf16> to vector<16x16xbf16>
    %c0_164 = arith.constant 0 : index
    %c4_165 = arith.constant 4 : index
    %214 = vector.load %arg9[%c0_164, %c4_165] : memref<16x26xbf16, #tpu.memory_space<vmem>>, vector<16x16xbf16>
    %cst_166 = arith.constant 0.000000e+00 : bf16
    %215 = vector.broadcast %cst_166 : bf16 to vector<16x16xbf16>
    %216 = vector.shape_cast %18 : vector<1x16xi1> to vector<1x16xi1>
    %217 = vector.broadcast %216 : vector<1x16xi1> to vector<16x16xi1>
    %218 = arith.select %217, %214, %215 : vector<16x16xi1>, vector<16x16xbf16>
    %cst_167 = arith.constant dense<0.000000e+00> : vector<16x16xf32>
    %219 = tpu.matmul %213, %218, %cst_167 {dimension_numbers = #tpu.dot_dimension_numbers<[1], [0], [0], [1], [0, 0, 1, 1], [], []>} : vector<16x16xbf16>, vector<16x16xbf16>, vector<16x16xf32> -> vector<16x16xf32>
    %220 = arith.addf %211, %219 : vector<16x16xf32>
    %c4_168 = arith.constant 4 : index
    %c0_169 = arith.constant 0 : index
    %c0_170 = arith.constant 0 : index
    %221 = vector.load %arg6[%c4_168, %c0_169, %c0_170] : memref<9x16x16xbf16, #tpu.memory_space<vmem>>, vector<1x16x16xbf16>
    %222 = vector.shape_cast %221 : vector<1x16x16xbf16> to vector<16x16xbf16>
    %c0_171 = arith.constant 0 : index
    %c5_172 = arith.constant 5 : index
    %223 = vector.load %arg9[%c0_171, %c5_172] : memref<16x26xbf16, #tpu.memory_space<vmem>>, vector<16x16xbf16>
    %cst_173 = arith.constant dense<0.000000e+00> : vector<16x16xf32>
    %224 = tpu.matmul %222, %223, %cst_173 {dimension_numbers = #tpu.dot_dimension_numbers<[1], [0], [0], [1], [0, 0, 1, 1], [], []>} : vector<16x16xbf16>, vector<16x16xbf16>, vector<16x16xf32> -> vector<16x16xf32>
    %225 = arith.addf %220, %224 : vector<16x16xf32>
    %c5_174 = arith.constant 5 : index
    %c0_175 = arith.constant 0 : index
    %c0_176 = arith.constant 0 : index
    %226 = vector.load %arg6[%c5_174, %c0_175, %c0_176] : memref<9x16x16xbf16, #tpu.memory_space<vmem>>, vector<1x16x16xbf16>
    %227 = vector.shape_cast %226 : vector<1x16x16xbf16> to vector<16x16xbf16>
    %c0_177 = arith.constant 0 : index
    %c6_178 = arith.constant 6 : index
    %228 = vector.load %arg9[%c0_177, %c6_178] : memref<16x26xbf16, #tpu.memory_space<vmem>>, vector<16x16xbf16>
    %cst_179 = arith.constant 0.000000e+00 : bf16
    %229 = vector.broadcast %cst_179 : bf16 to vector<16x16xbf16>
    %230 = vector.shape_cast %20 : vector<1x16xi1> to vector<1x16xi1>
    %231 = vector.broadcast %230 : vector<1x16xi1> to vector<16x16xi1>
    %232 = arith.select %231, %228, %229 : vector<16x16xi1>, vector<16x16xbf16>
    %cst_180 = arith.constant dense<0.000000e+00> : vector<16x16xf32>
    %233 = tpu.matmul %227, %232, %cst_180 {dimension_numbers = #tpu.dot_dimension_numbers<[1], [0], [0], [1], [0, 0, 1, 1], [], []>} : vector<16x16xbf16>, vector<16x16xbf16>, vector<16x16xf32> -> vector<16x16xf32>
    %234 = arith.addf %225, %233 : vector<16x16xf32>
    %c6_181 = arith.constant 6 : index
    %c0_182 = arith.constant 0 : index
    %c0_183 = arith.constant 0 : index
    %235 = vector.load %arg6[%c6_181, %c0_182, %c0_183] : memref<9x16x16xbf16, #tpu.memory_space<vmem>>, vector<1x16x16xbf16>
    %236 = vector.shape_cast %235 : vector<1x16x16xbf16> to vector<16x16xbf16>
    %c0_184 = arith.constant 0 : index
    %c8_185 = arith.constant 8 : index
    %237 = vector.load %arg9[%c0_184, %c8_185] : memref<16x26xbf16, #tpu.memory_space<vmem>>, vector<16x16xbf16>
    %cst_186 = arith.constant 0.000000e+00 : bf16
    %238 = vector.broadcast %cst_186 : bf16 to vector<16x16xbf16>
    %239 = vector.shape_cast %18 : vector<1x16xi1> to vector<1x16xi1>
    %240 = vector.broadcast %239 : vector<1x16xi1> to vector<16x16xi1>
    %241 = arith.select %240, %237, %238 : vector<16x16xi1>, vector<16x16xbf16>
    %cst_187 = arith.constant dense<0.000000e+00> : vector<16x16xf32>
    %242 = tpu.matmul %236, %241, %cst_187 {dimension_numbers = #tpu.dot_dimension_numbers<[1], [0], [0], [1], [0, 0, 1, 1], [], []>} : vector<16x16xbf16>, vector<16x16xbf16>, vector<16x16xf32> -> vector<16x16xf32>
    %243 = arith.addf %234, %242 : vector<16x16xf32>
    %c7_188 = arith.constant 7 : index
    %c0_189 = arith.constant 0 : index
    %c0_190 = arith.constant 0 : index
    %244 = vector.load %arg6[%c7_188, %c0_189, %c0_190] : memref<9x16x16xbf16, #tpu.memory_space<vmem>>, vector<1x16x16xbf16>
    %245 = vector.shape_cast %244 : vector<1x16x16xbf16> to vector<16x16xbf16>
    %c0_191 = arith.constant 0 : index
    %c9_192 = arith.constant 9 : index
    %246 = vector.load %arg9[%c0_191, %c9_192] : memref<16x26xbf16, #tpu.memory_space<vmem>>, vector<16x16xbf16>
    %cst_193 = arith.constant dense<0.000000e+00> : vector<16x16xf32>
    %247 = tpu.matmul %245, %246, %cst_193 {dimension_numbers = #tpu.dot_dimension_numbers<[1], [0], [0], [1], [0, 0, 1, 1], [], []>} : vector<16x16xbf16>, vector<16x16xbf16>, vector<16x16xf32> -> vector<16x16xf32>
    %248 = arith.addf %243, %247 : vector<16x16xf32>
    %c8_194 = arith.constant 8 : index
    %c0_195 = arith.constant 0 : index
    %c0_196 = arith.constant 0 : index
    %249 = vector.load %arg6[%c8_194, %c0_195, %c0_196] : memref<9x16x16xbf16, #tpu.memory_space<vmem>>, vector<1x16x16xbf16>
    %250 = vector.shape_cast %249 : vector<1x16x16xbf16> to vector<16x16xbf16>
    %c0_197 = arith.constant 0 : index
    %c10_198 = arith.constant 10 : index
    %251 = vector.load %arg9[%c0_197, %c10_198] : memref<16x26xbf16, #tpu.memory_space<vmem>>, vector<16x16xbf16>
    %cst_199 = arith.constant 0.000000e+00 : bf16
    %252 = vector.broadcast %cst_199 : bf16 to vector<16x16xbf16>
    %253 = vector.shape_cast %20 : vector<1x16xi1> to vector<1x16xi1>
    %254 = vector.broadcast %253 : vector<1x16xi1> to vector<16x16xi1>
    %255 = arith.select %254, %251, %252 : vector<16x16xi1>, vector<16x16xbf16>
    %cst_200 = arith.constant dense<0.000000e+00> : vector<16x16xf32>
    %256 = tpu.matmul %250, %255, %cst_200 {dimension_numbers = #tpu.dot_dimension_numbers<[1], [0], [0], [1], [0, 0, 1, 1], [], []>} : vector<16x16xbf16>, vector<16x16xbf16>, vector<16x16xf32> -> vector<16x16xf32>
    %257 = arith.addf %248, %256 : vector<16x16xf32>
    %c0_201 = arith.constant 0 : index
    %c0_202 = arith.constant 0 : index
    %258 = vector.load %arg7[%c0_201, %c0_202] : memref<16x1xf32, #tpu.memory_space<vmem>>, vector<16x1xf32>
    %259 = vector.broadcast %258 : vector<16x1xf32> to vector<16x16xf32>
    %260 = arith.addf %257, %259 : vector<16x16xf32>
    %cst_203 = arith.constant 0.000000e+00 : f32
    %261 = vector.broadcast %cst_203 : f32 to vector<16x16xf32>
    %262 = arith.maximumf %260, %261 : vector<16x16xf32>
    %c0_204 = arith.constant 0 : index
    %c0_205 = arith.constant 0 : index
    %c0_206 = arith.constant 0 : index
    %263 = vector.load %arg8[%c0_204, %c0_205, %c0_206] : memref<1x16x16xf32, #tpu.memory_space<vmem>>, vector<1x16x16xf32>
    %264 = vector.shape_cast %263 : vector<1x16x16xf32> to vector<16x16xf32>
    %265 = vector.shape_cast %262 : vector<16x16xf32> to vector<1x16x16xf32>
    tpu.vector_store %arg8[%c0_204, %c0_205, %c0_206], %265 {strides = array<i32>} : memref<1x16x16xf32, #tpu.memory_space<vmem>>, vector<1x16x16xf32>,
    return
  }
  func.func @transform_0(%arg0: i32) -> (i32, i32, i32) {
    %c0_i32 = arith.constant 0 : i32
    %c0_i32_0 = arith.constant 0 : i32
    %c0_i32_1 = arith.constant 0 : i32
    return %arg0, %c0_i32, %c0_i32_0 : i32, i32, i32
  }
  func.func @transform_1(%arg0: i32) -> (i32, i32, i32) {
    %c0_i32 = arith.constant 0 : i32
    %c0_i32_0 = arith.constant 0 : i32
    %c0_i32_1 = arith.constant 0 : i32
    return %arg0, %c0_i32, %c0_i32_0 : i32, i32, i32
  }
  func.func @transform_2(%arg0: i32) -> (i32, i32, i32) {
    %c0_i32 = arith.constant 0 : i32
    %c0_i32_0 = arith.constant 0 : i32
    %c0_i32_1 = arith.constant 0 : i32
    %c0_i32_2 = arith.constant 0 : i32
    return %c0_i32, %c0_i32_0, %c0_i32_1 : i32, i32, i32
  }
  func.func @transform_3(%arg0: i32) -> (i32, i32, i32) {
    %c0_i32 = arith.constant 0 : i32
    %c0_i32_0 = arith.constant 0 : i32
    %c0_i32_1 = arith.constant 0 : i32
    %c0_i32_2 = arith.constant 0 : i32
    return %c0_i32, %c0_i32_0, %c0_i32_1 : i32, i32, i32
  }
  func.func @transform_4(%arg0: i32) -> (i32, i32) {
    %c0_i32 = arith.constant 0 : i32
    %c0_i32_0 = arith.constant 0 : i32
    %c0_i32_1 = arith.constant 0 : i32
    return %c0_i32, %c0_i32_0 : i32, i32
  }
  func.func @transform_5(%arg0: i32) -> (i32, i32, i32) {
    %c0_i32 = arith.constant 0 : i32
    %c0_i32_0 = arith.constant 0 : i32
    %c0_i32_1 = arith.constant 0 : i32
    %c0_i32_2 = arith.constant 0 : i32
    return %c0_i32, %c0_i32_0, %c0_i32_1 : i32, i32, i32
  }
  func.func @transform_6(%arg0: i32) -> (i32, i32) {
    %c0_i32 = arith.constant 0 : i32
    %c0_i32_0 = arith.constant 0 : i32
    %c0_i32_1 = arith.constant 0 : i32
    return %c0_i32, %c0_i32_0 : i32, i32
  }
  func.func @transform_7(%arg0: i32) -> (i32, i32, i32) {
    %c0_i32 = arith.constant 0 : i32
    %c0_i32_0 = arith.constant 0 : i32
    %c0_i32_1 = arith.constant 0 : i32
    return %arg0, %c0_i32, %c0_i32_0 : i32, i32, i32
  }
}

</mosaic_0001>

<llo_original>
// kernel: tpu_custom_call.1
$region0: #{tpu_custom_call.1}
  #allocation0 [shape = 'u32[]', space=smem, size = 0x4, offset = 0x4, fixed_abs, tag = 'smem constant byte address 0x4 - core index']
  #allocation1 [shape = 'u32[144,128]{1,0:T(1,128)}', space=vmem, size = 0x12000, scoped, tag = 'internal scratch']
  #allocation2 [shape = 'bf16[16,26]{1,0:T(16,128)(2,1)}', space=vmem, size = 0x1000, scoped, tag = 'scratch operand']
  %s0 = inlined_call_operand.vmem [shape: bf16[2,32,26], index: 0, kind: input, shape index: {}]
  %s1 = inlined_call_operand.vmem [shape: bf16[2,16,26], index: 1, kind: input, shape index: {}]
  %s2 = inlined_call_operand.vmem [shape: bf16[9,16,32], index: 2, kind: input, shape index: {}]
  %s3 = inlined_call_operand.hbm [shape: bf16[9,16,16], index: 3, kind: input, shape index: {}]
  %s4 = inlined_call_operand.vmem [shape: f32[16,1], index: 4, kind: input, shape index: {}]
  %s5 = inlined_call_operand.hbm [shape: bf16[9,16,16], index: 5, kind: input, shape index: {}]
  %s6 = inlined_call_operand.vmem [shape: f32[16,1], index: 6, kind: input, shape index: {}]
  %s7 = inlined_call_operand.hbm [shape: f32[2,16,16], index: 7, kind: output, shape index: {}]
  %s8 = sld [smem:[#allocation0]]
  $region69: #{tpu_custom_call.1} parent=0
    _
  %s10 = ssub.s32 1, %s8
  %s11 = scalar_select 0, %s10, %s8
  $region1: #{tpu_custom_call.1} parent=0
    #allocation3 [shape = 'u8[36864]{0}', space=vmem, size = 0x9000, scoped, tag = 'input window, operand 3, single buffered']
    #allocation4 [shape = 's32[2]{0}', space=sflag, size = 0x8, scoped, tag = 'scoped memory for tpu_custom_call.1']
    #allocation5 [shape = 's32[2]{0}', space=sflag, size = 0x8, scoped, tag = 'scoped memory for tpu_custom_call.1']
    #allocation6 [shape = 'u8[36864]{0}', space=vmem, size = 0x9000, scoped, tag = 'input window, operand 5, single buffered']
    #allocation7 [shape = 's32[1]{0}', space=sflag, size = 0x4, scoped, tag = 'scoped memory for tpu_custom_call.1']
    #allocation8 [shape = 'u8[16384]{0}', space=vmem, size = 0x4000, scoped, tag = 'output window, operand 0']
    %12 = vsyncpa [#allocation4], 0
    %13 = vsyncpa [#allocation7], 0
    %14 = vsyncpa [#allocation5], 0
    %s15 = scalar_lea.sflag [#allocation5], 1
    %16 = vsyncpa %s15, 0
    loop: start=0, step=1, limit=4
    $region2: #{tpu_custom_call.1} parent=1 // loop_pre_header
      _
    $region3: #{tpu_custom_call.1} parent=1 // loop_header
      %s18 = sphi 0, %s22
      %p19 = scmp.ge.s32.totalorder %s18, 4
      %s28 = sphi 0, %s30
      %s31 = sphi 0, %s28
      %s32 = sphi 0, %s31
      %s48 = sphi 0, %s32
      %s54 = sphi 0, %s56
      %s57 = sphi 0, %s54
      %s58 = sphi 0, %s57
      %s74 = sphi 0, %s58
      %s78 = sphi 0, %s78
      %s80 = sphi 0, %s78
      %s81 = sphi 0, %s80
      %s95 = sphi 0, %s81
      %s99 = sphi 0, %s99
      %s101 = sphi 0, %s99
      %s102 = sphi 0, %s101
      %s116 = sphi 0, %s102
      %s120 = sphi 0, %s120
      %s122 = sphi 0, %s120
      %s123 = sphi 0, %s122
      %s137 = sphi 0, %s123
      %s141 = sphi 0, %s141
      %s143 = sphi 0, %s141
      %s144 = sphi 0, %s143
      %s158 = sphi 0, %s144
      %s162 = sphi 0, %s162
      %s164 = sphi 0, %s162
      %s165 = sphi 0, %s164
      %s179 = sphi 0, %s165
      %s185 = sphi 0, %s187
      %s188 = sphi 0, %s185
      %s189 = sphi 0, %s188
      %s205 = sphi 0, %s189
    $region4: #{tpu_custom_call.1} parent=1 // loop_header_branch
      %21 = sbr.rel (%p19) target = $region8
    $region5: #{tpu_custom_call.1} parent=1 // loop_body
      %s23 = ssub.s32 %s18, 1
      %s24 = ssub.s32 %s18, 2
      %s25 = sadd.s32 %s18, 1
      %s26 = ssub.s32 %s18, %s25
      %p27 = scmp.eq.s32.totalorder %s26, 0
      %s29 = sadd.s32 %s28, 1
      %s30 = scalar_select %p27, %s28, %s29
      %p33 = pneg %p27
      %p34 = scmp.eq.s32.totalorder %s18, 1
      %p35 = por %p33, %p34
      %p36 = scmp.ne.s32.totalorder %s28, %s31
      %p37 = scmp.eq.s32.totalorder %s18, 0
      %p38 = por %p36, %p37
      %p39 = scmp.ne.s32.totalorder %s28, %s31
      %p40 = scmp.eq.s32.totalorder %s23, 1
      %p41 = por %p39, %p40
      %p42 = scmp.ne.s32.totalorder %s31, %s32
      %p43 = scmp.eq.s32.totalorder %s23, 0
      %p44 = por %p42, %p43
      %p45 = scmp.ne.s32.totalorder %s31, %s32
      %p46 = scmp.eq.s32.totalorder %s24, 1
      %p47 = por %p45, %p46
      %p49 = scmp.ne.s32.totalorder %s32, %s48
      %p50 = scmp.eq.s32.totalorder %s24, 0
      %p51 = por %p49, %p50
      %s52 = ssub.s32 %s18, %s25
      %p53 = scmp.eq.s32.totalorder %s52, 0
      %s55 = sadd.s32 %s54, 1
      %s56 = scalar_select %p53, %s54, %s55
      %p59 = pneg %p53
      %p60 = scmp.eq.s32.totalorder %s18, 1
      %p61 = por %p59, %p60
      %p62 = scmp.ne.s32.totalorder %s54, %s57
      %p63 = scmp.eq.s32.totalorder %s18, 0
      %p64 = por %p62, %p63
      %p65 = scmp.ne.s32.totalorder %s54, %s57
      %p66 = scmp.eq.s32.totalorder %s23, 1
      %p67 = por %p65, %p66
      %p68 = scmp.ne.s32.totalorder %s57, %s58
      %p69 = scmp.eq.s32.totalorder %s23, 0
      %p70 = por %p68, %p69
      %p71 = scmp.ne.s32.totalorder %s57, %s58
      %p72 = scmp.eq.s32.totalorder %s24, 1
      %p73 = por %p71, %p72
      %p75 = scmp.ne.s32.totalorder %s58, %s74
      %p76 = scmp.eq.s32.totalorder %s24, 0
      %p77 = por %p75, %p76
      %s79 = sadd.s32 %s78, 1
      %p82 = scmp.eq.s32.totalorder %s18, 1
      %p83 = scmp.ne.s32.totalorder %s78, %s80
      %p84 = scmp.eq.s32.totalorder %s18, 0
      %p85 = por %p83, %p84
      %p86 = scmp.ne.s32.totalorder %s78, %s80
      %p87 = scmp.eq.s32.totalorder %s23, 1
      %p88 = por %p86, %p87
      %p89 = scmp.ne.s32.totalorder %s80, %s81
      %p90 = scmp.eq.s32.totalorder %s23, 0
      %p91 = por %p89, %p90
      %p92 = scmp.ne.s32.totalorder %s80, %s81
      %p93 = scmp.eq.s32.totalorder %s24, 1
      %p94 = por %p92, %p93
      %p96 = scmp.ne.s32.totalorder %s81, %s95
      %p97 = scmp.eq.s32.totalorder %s24, 0
      %p98 = por %p96, %p97
      %s100 = sadd.s32 %s99, 1
      %p103 = scmp.eq.s32.totalorder %s18, 1
      %p104 = scmp.ne.s32.totalorder %s99, %s101
      %p105 = scmp.eq.s32.totalorder %s18, 0
      %p106 = por %p104, %p105
      %p107 = scmp.ne.s32.totalorder %s99, %s101
      %p108 = scmp.eq.s32.totalorder %s23, 1
      %p109 = por %p107, %p108
      %p110 = scmp.ne.s32.totalorder %s101, %s102
      %p111 = scmp.eq.s32.totalorder %s23, 0
      %p112 = por %p110, %p111
      %p113 = scmp.ne.s32.totalorder %s101, %s102
      %p114 = scmp.eq.s32.totalorder %s24, 1
      %p115 = por %p113, %p114
      %p117 = scmp.ne.s32.totalorder %s102, %s116
      %p118 = scmp.eq.s32.totalorder %s24, 0
      %p119 = por %p117, %p118
      %s121 = sadd.s32 %s120, 1
      %p124 = scmp.eq.s32.totalorder %s18, 1
      %p125 = scmp.ne.s32.totalorder %s120, %s122
      %p126 = scmp.eq.s32.totalorder %s18, 0
      %p127 = por %p125, %p126
      %p128 = scmp.ne.s32.totalorder %s120, %s122
      %p129 = scmp.eq.s32.totalorder %s23, 1
      %p130 = por %p128, %p129
      %p131 = scmp.ne.s32.totalorder %s122, %s123
      %p132 = scmp.eq.s32.totalorder %s23, 0
      %p133 = por %p131, %p132
      %p134 = scmp.ne.s32.totalorder %s122, %s123
      %p135 = scmp.eq.s32.totalorder %s24, 1
      %p136 = por %p134, %p135
      %p138 = scmp.ne.s32.totalorder %s123, %s137
      %p139 = scmp.eq.s32.totalorder %s24, 0
      %p140 = por %p138, %p139
      %s142 = sadd.s32 %s141, 1
      %p145 = scmp.eq.s32.totalorder %s18, 1
      %p146 = scmp.ne.s32.totalorder %s141, %s143
      %p147 = scmp.eq.s32.totalorder %s18, 0
      %p148 = por %p146, %p147
      %p149 = scmp.ne.s32.totalorder %s141, %s143
      %p150 = scmp.eq.s32.totalorder %s23, 1
      %p151 = por %p149, %p150
      %p152 = scmp.ne.s32.totalorder %s143, %s144
      %p153 = scmp.eq.s32.totalorder %s23, 0
      %p154 = por %p152, %p153
      %p155 = scmp.ne.s32.totalorder %s143, %s144
      %p156 = scmp.eq.s32.totalorder %s24, 1
      %p157 = por %p155, %p156
      %p159 = scmp.ne.s32.totalorder %s144, %s158
      %p160 = scmp.eq.s32.totalorder %s24, 0
      %p161 = por %p159, %p160
      %s163 = sadd.s32 %s162, 1
      %p166 = scmp.eq.s32.totalorder %s18, 1
      %p167 = scmp.ne.s32.totalorder %s162, %s164
      %p168 = scmp.eq.s32.totalorder %s18, 0
      %p169 = por %p167, %p168
      %p170 = scmp.ne.s32.totalorder %s162, %s164
      %p171 = scmp.eq.s32.totalorder %s23, 1
      %p172 = por %p170, %p171
      %p173 = scmp.ne.s32.totalorder %s164, %s165
      %p174 = scmp.eq.s32.totalorder %s23, 0
      %p175 = por %p173, %p174
      %p176 = scmp.ne.s32.totalorder %s164, %s165
      %p177 = scmp.eq.s32.totalorder %s24, 1
      %p178 = por %p176, %p177
      %p180 = scmp.ne.s32.totalorder %s165, %s179
      %p181 = scmp.eq.s32.totalorder %s24, 0
      %p182 = por %p180, %p181
      %s183 = ssub.s32 %s18, %s25
      %p184 = scmp.eq.s32.totalorder %s183, 0
      %s186 = sadd.s32 %s185, 1
      %s187 = scalar_select %p184, %s185, %s186
      %p190 = pneg %p184
      %p191 = scmp.eq.s32.totalorder %s18, 1
      %p192 = por %p190, %p191
      %p193 = scmp.ne.s32.totalorder %s185, %s188
      %p194 = scmp.eq.s32.totalorder %s18, 0
      %p195 = por %p193, %p194
      %p196 = scmp.ne.s32.totalorder %s185, %s188
      %p197 = scmp.eq.s32.totalorder %s23, 1
      %p198 = por %p196, %p197
      %p199 = scmp.ne.s32.totalorder %s188, %s189
      %p200 = scmp.eq.s32.totalorder %s23, 0
      %p201 = por %p199, %p200
      %p202 = scmp.ne.s32.totalorder %s188, %s189
      %p203 = scmp.eq.s32.totalorder %s24, 1
      %p204 = por %p202, %p203
      %p206 = scmp.ne.s32.totalorder %s189, %s205
      %p207 = scmp.eq.s32.totalorder %s24, 0
      %p208 = por %p206, %p207
      %p209 = scmp.le.s32.totalorder 1, %s18
      %p210 = scmp.lt.s32.totalorder %s18, 3
      %p211 = pnand %p209, %p210
      %p212 = pneg %p211
      // Predicated region
      $region9: #{tpu_custom_call.1} parent=5 // pred_check
        _
      $region10: #{tpu_custom_call.1} parent=5 // pred_check_branch
        %214 = sbr.rel (%p211) target = $region12
      $region11: #{tpu_custom_call.1} parent=5 // pred_region
        %s215 = ssub.s32 %s18, 1
        // Predicated region
        $region13: #{tpu_custom_call.1} parent=11 // pred_check
          %p216 = pneg %p91
        $region14: #{tpu_custom_call.1} parent=11 // pred_check_branch
          %218 = sbr.rel (%p216) target = $region16
        $region15: #{tpu_custom_call.1} parent=11 // pred_region
          _
        $region16: #{tpu_custom_call.1} parent=11 // pred_fallthru
          _
        // Predicated region
        $region17: #{tpu_custom_call.1} parent=11 // pred_check
          %p219 = pneg %p112
        $region18: #{tpu_custom_call.1} parent=11 // pred_check_branch
          %221 = sbr.rel (%p219) target = $region20
        $region19: #{tpu_custom_call.1} parent=11 // pred_region
          %s223 = ssub.s32 1152, 1152
          %224 = vsyncadd [#allocation4], %s223
          %s225 = sshll.u32 [#allocation3], 4
          %s226 = int_to_ptr.vmem [resolvable:$true] %s225
          %231 = dma.hbm_to_vmem [thread:$0]  %s3, 1152, %s226, [#allocation4], 64, 64, 4
        $region20: #{tpu_custom_call.1} parent=11 // pred_fallthru
          _
        // Predicated region
        $region21: #{tpu_custom_call.1} parent=11 // pred_check
          %p232 = pneg %p133
        $region22: #{tpu_custom_call.1} parent=11 // pred_check_branch
          %234 = sbr.rel (%p232) target = $region24
        $region23: #{tpu_custom_call.1} parent=11 // pred_region
          _
        $region24: #{tpu_custom_call.1} parent=11 // pred_fallthru
          _
        // Predicated region
        $region25: #{tpu_custom_call.1} parent=11 // pred_check
          %p235 = pneg %p154
        $region26: #{tpu_custom_call.1} parent=11 // pred_check_branch
          %237 = sbr.rel (%p235) target = $region28
        $region27: #{tpu_custom_call.1} parent=11 // pred_region
          %s239 = ssub.s32 1152, 1152
          %240 = vsyncadd [#allocation7], %s239
          %s241 = sshll.u32 [#allocation6], 4
          %s242 = int_to_ptr.vmem [resolvable:$true] %s241
          %247 = dma.hbm_to_vmem [thread:$0]  %s5, 1152, %s242, [#allocation7], 64, 64, 4
        $region28: #{tpu_custom_call.1} parent=11 // pred_fallthru
          _
        // Predicated region
        $region29: #{tpu_custom_call.1} parent=11 // pred_check
          %p248 = pneg %p175
        $region30: #{tpu_custom_call.1} parent=11 // pred_check_branch
          %250 = sbr.rel (%p248) target = $region32
        $region31: #{tpu_custom_call.1} parent=11 // pred_region
          _
        $region32: #{tpu_custom_call.1} parent=11 // pred_fallthru
          _
      $region12: #{tpu_custom_call.1} parent=5 // pred_fallthru
        _
      %p251 = scmp.lt.s32.totalorder %s18, 2
      // Predicated region
      $region33: #{tpu_custom_call.1} parent=5 // pred_check
        %p252 = pneg %p251
      $region34: #{tpu_custom_call.1} parent=5 // pred_check_branch
        %254 = sbr.rel (%p252) target = $region36
      $region35: #{tpu_custom_call.1} parent=5 // pred_region
        // Predicated region
        $region37: #{tpu_custom_call.1} parent=35 // pred_check
          %p255 = pneg %p38
        $region38: #{tpu_custom_call.1} parent=35 // pred_check_branch
          %257 = sbr.rel (%p255) target = $region40
        $region39: #{tpu_custom_call.1} parent=35 // pred_region
          %p258 = scmp.lt.s32.totalorder %s18, 1
          %s259 = scalar_select %p258, %s18, 1
          %s260 = smul.addr %s259, 4
          %s261 = smul.addr %s260, 4
          %s262 = scalar_lea.vmem %s0, %s261
        $region40: #{tpu_custom_call.1} parent=35 // pred_fallthru
          _
        // Predicated region
        $region41: #{tpu_custom_call.1} parent=35 // pred_check
          %p263 = pneg %p64
        $region42: #{tpu_custom_call.1} parent=35 // pred_check_branch
          %265 = sbr.rel (%p263) target = $region44
        $region43: #{tpu_custom_call.1} parent=35 // pred_region
          %p266 = scmp.lt.s32.totalorder %s18, 1
          %s267 = scalar_select %p266, %s18, 1
          %s268 = smul.addr %s267, 2
          %s269 = smul.addr %s268, 4
          %s270 = scalar_lea.vmem %s1, %s269
        $region44: #{tpu_custom_call.1} parent=35 // pred_fallthru
          _
      $region36: #{tpu_custom_call.1} parent=5 // pred_fallthru
        _
      %p271 = scmp.le.s32.totalorder 1, %s18
      %p272 = scmp.lt.s32.totalorder %s18, 3
      %p273 = pnand %p271, %p272
      %p274 = pneg %p273
      // Predicated region
      $region45: #{tpu_custom_call.1} parent=5 // pred_check
        _
      $region46: #{tpu_custom_call.1} parent=5 // pred_check_branch
        %276 = sbr.rel (%p273) target = $region48
      $region47: #{tpu_custom_call.1} parent=5 // pred_region
        %s277 = ssub.s32 %s18, 1
        // Predicated region
        $region49: #{tpu_custom_call.1} parent=47 // pred_check
          %p278 = pneg %p112
        $region50: #{tpu_custom_call.1} parent=47 // pred_check_branch
          %280 = sbr.rel (%p278) target = $region52
        $region51: #{tpu_custom_call.1} parent=47 // pred_region
          %281 = dma.done [#allocation4], 1152
        $region52: #{tpu_custom_call.1} parent=47 // pred_fallthru
          _
        // Predicated region
        $region53: #{tpu_custom_call.1} parent=47 // pred_check
          %p282 = pneg %p154
        $region54: #{tpu_custom_call.1} parent=47 // pred_check_branch
          %284 = sbr.rel (%p282) target = $region56
        $region55: #{tpu_custom_call.1} parent=47 // pred_region
          %285 = dma.done [#allocation7], 1152
        $region56: #{tpu_custom_call.1} parent=47 // pred_fallthru
          _
        %p286 = scmp.lt.s32.totalorder %s23, 1
        %s287 = scalar_select %p286, %s23, 1
        %s288 = smul.addr %s287, 4
        %s289 = smul.addr %s288, 4
        %s290 = scalar_lea.vmem %s0, %s289
        %p291 = pneg %p44
        %p292 = pneg %p41
        %p293 = scmp.lt.s32.totalorder %s23, 1
        %s294 = scalar_select %p293, %s23, 1
        %s295 = smul.addr %s294, 2
        %s296 = smul.addr %s295, 4
        %s297 = scalar_lea.vmem %s1, %s296
        %p298 = pneg %p70
        %p299 = pneg %p67
        %p300 = pneg %p91
        %p301 = pneg %p88
        %p302 = pneg %p112
        %p303 = pneg %p109
        %p304 = pneg %p133
        %p305 = pneg %p130
        %p306 = pneg %p154
        %p307 = pneg %p151
        %p308 = pneg %p175
        %p309 = pneg %p172
        %p310 = pneg %p201
        %p311 = pneg %p198
        %s312 = sand.u32 %s188, 1
        %s313 = scalar_lea.sflag [#allocation5], %s312
        %s314 = sand.u32 %s188, 1
        %s315 = smul.addr %s314, 16
        %s316 = scalar_lea.vmem [#allocation8], %s315
        %p317 = scmp.lt.s32.totalorder %s23, 1
        %s318 = scalar_select %p317, %s23, 1
        %s319 = smul.addr %s318, 4
        %s320 = smul.addr %s319, 4
        %s321 = scalar_lea.vmem %s0, %s320
        %p322 = scmp.lt.s32.totalorder %s23, 1
        %s323 = scalar_select %p322, %s23, 1
        %s324 = smul.addr %s323, 2
        %s325 = smul.addr %s324, 4
        %s326 = scalar_lea.vmem %s1, %s325
        %v330 = vlaneseq
        %v331 = vand.u32 %v330, 127
        %vm332 = vcmp.lt.s32.totalorder %v331, 0
        %v333 = vsub.s32 0, %v331
        %v334 = vsel %vm332, %v333, %v331
        %v335 = vshrl.u32 %v334, 2
        %v336 = vand.u32 %v334, 3
        %v337 = vsub.s32 0, %v336
        %v338 = vsel %vm332, %v337, %v336
        %vm339 = vcmp.ne.s32.totalorder %v338, 0
        %vm340 = vcmp.lt.s32.totalorder %v338, 0
        %vm341 = vmand %vm340, %vm339
        %v342 = vadd.s32 %v338, 4
        %v343 = vsel %vm341, %v342, %v338
        %vm344 = vcmp.ne.s32.totalorder %v343, 0
        %vm345 = vcmp.ne.s32.totalorder %v343, 3
        %v346 = vld [vmem:[%s2] sm:$0xf]
        %v347 = vld [vmem:[%s2 + $0x4] sm:$0xf]
        %v348 = vld [vmem:[%s321] sm:$0xf]
        %v349 = vld [vmem:[%s321 + $0x4] sm:$0xf]
        %v350 = vld [vmem:[%s321 + $0x8] sm:$0xf]
        %v351 = vld [vmem:[%s321 + $0xc] sm:$0xf]
        %v352 = vsel %vm344, 1, 0
        %vm353 = vcmp.eq.s32.totalorder %v352, 1
        %vm354 = vmpackc.low %vm353, %vm353
        %v355 = vsel %vm354, %v348, 0
        %v356 = vsel %vm354, %v349, 0
        %v357 = vsel %vm354, %v350, 0
        %v358 = vsel %vm354, %v351, 0
        %v359 = vld [vmem:[#allocation3] sm:$0xf]
        %v360 = vld [vmem:[#allocation3 + $0x4] sm:$0xf]
        %v361 = vld [vmem:[%s326] sm:$0xf]
        %v362 = vld [vmem:[%s326 + $0x4] sm:$0xf]
        %v363 = vsel %vm354, %v361, 0
        %v364 = vsel %vm354, %v362, 0
        %v367 = vunpack.c.l.b16 %v359
        %v368 = vunpack.c.l.b16 %v360
        %v369 = vpack.c.b16 %v368, %v367
        %v372 = vunpack.c.l.b16 %v363
        %v373 = vunpack.c.l.b16 %v364
        %v374 = vpack.c.b16 %v373, %v372
        %vm376 = vcmask 130048
        %v378 = vsel %vm376, %v369, 0
        %380 = vmatprep.subr.bf16.mxu0 0
        %381 = vmatpush1.bf16.msra.mxu0 %v374
        %382 = vmatprep.subr.bf16.mxu0 0
        %383 = vmatpush1.bf16.msra.mxu0 0
        %384 = vmatprep.subr.bf16.mxu0 0
        %385 = vmatpush1.bf16.msra.mxu0 0
        %386 = vmatprep.subr.bf16.mxu0 0
        %387 = vmatpush1.bf16.msra.mxu0 0
        %388 = vmatprep.subr.bf16.mxu0 0
        %389 = vmatpush1.bf16.msra.mxu0 0
        %390 = vmatprep.subr.bf16.mxu0 0
        %391 = vmatpush1.bf16.msra.mxu0 0
        %392 = vmatprep.subr.bf16.mxu0 0
        %393 = vmatpush1.bf16.msra.mxu0 0
        %394 = vmatprep.subr.bf16.mxu0 0
        %395 = vmatpush1.bf16.msra.mxu0 0
        %396 = vmatprep.subr.bf16.mxu0 0
        %397 = vmatpush1.bf16.msra.mxu0 0
        %398 = vmatprep.subr.bf16.mxu0 0
        %399 = vmatpush1.bf16.msra.mxu0 0
        %400 = vmatprep.subr.bf16.mxu0 0
        %401 = vmatpush1.bf16.msra.mxu0 0
        %402 = vmatprep.subr.bf16.mxu0 0
        %403 = vmatpush1.bf16.msra.mxu0 0
        %404 = vmatprep.subr.bf16.mxu0 0
        %405 = vmatpush1.bf16.msra.mxu0 0
        %406 = vmatprep.subr.bf16.mxu0 0
        %407 = vmatpush1.bf16.msra.mxu0 0
        %408 = vmatprep.subr.bf16.mxu0 0
        %409 = vmatpush1.bf16.msra.mxu0 0
        %410 = vmatprep.subr.bf16.mxu0 0
        %411 = vmatpush1.bf16.msra.mxu0 0
        %412 = vmatprep.mubr.bf16.mxu0 0
        %413 = vmatmul.mubr.bf16.gmra.mrb[0].mxu0 %v378
        %v414 = vpop.f32.mrb[0].mxu0
        %v415 = vadd.f32 0.0, %v414
        %v416 = vpop.f32.mrb[0].mxu0
        %v417 = vpop.f32.mrb[0].mxu0
        %v418 = vadd.f32 0.0, %v417
        %v419 = vpop.f32.mrb[0].mxu0
        %420 = vdwg.mxu0
        %v423 = vunpack.c.l.b16 %v346
        %v424 = vunpack.c.l.b16 %v347
        %v425 = vpack.c.b16 %v424, %v423
        %v430 = vunpack.c.l.b16 %v355
        %v431 = vunpack.c.l.b16 %v356
        %v432 = vunpack.c.l.b16 %v357
        %v433 = vunpack.c.l.b16 %v358
        %v434 = vpack.c.b16 %v431, %v430
        %v435 = vpack.c.b16 %v433, %v432
        %vm438 = vcmask 261120
        %v440 = vsel %vm438, %v425, 0
        %442 = vmatprep.subr.bf16.mxu0 0
        %443 = vmatpush1.bf16.msra.mxu0 %v434
        %444 = vmatprep.subr.bf16.mxu0 0
        %445 = vmatpush1.bf16.msra.mxu0 %v435
        %446 = vmatprep.subr.bf16.mxu0 0
        %447 = vmatpush1.bf16.msra.mxu0 0
        %448 = vmatprep.subr.bf16.mxu0 0
        %449 = vmatpush1.bf16.msra.mxu0 0
        %450 = vmatprep.subr.bf16.mxu0 0
        %451 = vmatpush1.bf16.msra.mxu0 0
        %452 = vmatprep.subr.bf16.mxu0 0
        %453 = vmatpush1.bf16.msra.mxu0 0
        %454 = vmatprep.subr.bf16.mxu0 0
        %455 = vmatpush1.bf16.msra.mxu0 0
        %456 = vmatprep.subr.bf16.mxu0 0
        %457 = vmatpush1.bf16.msra.mxu0 0
        %458 = vmatprep.subr.bf16.mxu0 0
        %459 = vmatpush1.bf16.msra.mxu0 0
        %460 = vmatprep.subr.bf16.mxu0 0
        %461 = vmatpush1.bf16.msra.mxu0 0
        %462 = vmatprep.subr.bf16.mxu0 0
        %463 = vmatpush1.bf16.msra.mxu0 0
        %464 = vmatprep.subr.bf16.mxu0 0
        %465 = vmatpush1.bf16.msra.mxu0 0
        %466 = vmatprep.subr.bf16.mxu0 0
        %467 = vmatpush1.bf16.msra.mxu0 0
        %468 = vmatprep.subr.bf16.mxu0 0
        %469 = vmatpush1.bf16.msra.mxu0 0
        %470 = vmatprep.subr.bf16.mxu0 0
        %471 = vmatpush1.bf16.msra.mxu0 0
        %472 = vmatprep.subr.bf16.mxu0 0
        %473 = vmatpush1.bf16.msra.mxu0 0
        %474 = vmatprep.mubr.bf16.mxu0 0
        %475 = vmatmul.mubr.bf16.gmra.mrb[0].mxu0 %v440
        %v476 = vpop.f32.mrb[0].mxu0
        %v477 = vadd.f32 %v415, %v476
        %v478 = vpop.f32.mrb[0].mxu0
        %v479 = vpop.f32.mrb[0].mxu0
        %v480 = vadd.f32 %v418, %v479
        %v481 = vpop.f32.mrb[0].mxu0
        %482 = vdwg.mxu0
        %s483 = scalar_lea.vmem %s2, 8
        %v484 = vld [vmem:[%s483] sm:$0xf]
        %v485 = vld [vmem:[%s483 + $0x4] sm:$0xf]
        %v488 = vunpack.c.l.b16 %v484
        %v489 = vunpack.c.l.b16 %v485
        %v490 = vpack.c.b16 %v489, %v488
        %v495 = vunpack.c.l.b16 %v348
        %v496 = vunpack.c.l.b16 %v349
        %v497 = vunpack.c.l.b16 %v350
        %v498 = vunpack.c.l.b16 %v351
        %v499 = vpack.c.b16 %v496, %v495
        %v500 = vpack.c.b16 %v498, %v497
        %501 = vrot.lane.b32.xlu0 %v499, 127
        %v502 = vpop.permute.xlu0 %501
        %503 = vrot.lane.b32.xlu0 %v500, 127
        %v504 = vpop.permute.xlu0 %503
        %v508 = vsel %vm438, %v490, 0
        %510 = vmatprep.subr.bf16.mxu0 0
        %511 = vmatpush1.bf16.msra.mxu0 %v502
        %512 = vmatprep.subr.bf16.mxu0 0
        %513 = vmatpush1.bf16.msra.mxu0 %v504
        %514 = vmatprep.subr.bf16.mxu0 0
        %515 = vmatpush1.bf16.msra.mxu0 0
        %516 = vmatprep.subr.bf16.mxu0 0
        %517 = vmatpush1.bf16.msra.mxu0 0
        %518 = vmatprep.subr.bf16.mxu0 0
        %519 = vmatpush1.bf16.msra.mxu0 0
        %520 = vmatprep.subr.bf16.mxu0 0
        %521 = vmatpush1.bf16.msra.mxu0 0
        %522 = vmatprep.subr.bf16.mxu0 0
        %523 = vmatpush1.bf16.msra.mxu0 0
        %524 = vmatprep.subr.bf16.mxu0 0
        %525 = vmatpush1.bf16.msra.mxu0 0
        %526 = vmatprep.subr.bf16.mxu0 0
        %527 = vmatpush1.bf16.msra.mxu0 0
        %528 = vmatprep.subr.bf16.mxu0 0
        %529 = vmatpush1.bf16.msra.mxu0 0
        %530 = vmatprep.subr.bf16.mxu0 0
        %531 = vmatpush1.bf16.msra.mxu0 0
        %532 = vmatprep.subr.bf16.mxu0 0
        %533 = vmatpush1.bf16.msra.mxu0 0
        %534 = vmatprep.subr.bf16.mxu0 0
        %535 = vmatpush1.bf16.msra.mxu0 0
        %536 = vmatprep.subr.bf16.mxu0 0
        %537 = vmatpush1.bf16.msra.mxu0 0
        %538 = vmatprep.subr.bf16.mxu0 0
        %539 = vmatpush1.bf16.msra.mxu0 0
        %540 = vmatprep.subr.bf16.mxu0 0
        %541 = vmatpush1.bf16.msra.mxu0 0
        %542 = vmatprep.mubr.bf16.mxu0 0
        %543 = vmatmul.mubr.bf16.gmra.mrb[0].mxu0 %v508
        %v544 = vpop.f32.mrb[0].mxu0
        %v545 = vadd.f32 0.0, %v544
        %v546 = vpop.f32.mrb[0].mxu0
        %v547 = vpop.f32.mrb[0].mxu0
        %v548 = vadd.f32 0.0, %v547
        %v549 = vpop.f32.mrb[0].mxu0
        %550 = vdwg.mxu0
        %v551 = vadd.f32 %v477, %v545
        %v552 = vadd.f32 %v480, %v548
        %s553 = scalar_lea.vmem [#allocation3], 8
        %v554 = vld [vmem:[%s553] sm:$0xf]
        %v555 = vld [vmem:[%s553 + $0x4] sm:$0xf]
        %v558 = vunpack.c.l.b16 %v554
        %v559 = vunpack.c.l.b16 %v555
        %v560 = vpack.c.b16 %v559, %v558
        %v563 = vunpack.c.l.b16 %v361
        %v564 = vunpack.c.l.b16 %v362
        %v565 = vpack.c.b16 %v564, %v563
        %566 = vrot.lane.b32.xlu0 %v565, 127
        %v567 = vpop.permute.xlu0 %566
        %v570 = vsel %vm376, %v560, 0
        %572 = vmatprep.subr.bf16.mxu0 0
        %573 = vmatpush1.bf16.msra.mxu0 %v567
        %574 = vmatprep.subr.bf16.mxu0 0
        %575 = vmatpush1.bf16.msra.mxu0 0
        %576 = vmatprep.subr.bf16.mxu0 0
        %577 = vmatpush1.bf16.msra.mxu0 0
        %578 = vmatprep.subr.bf16.mxu0 0
        %579 = vmatpush1.bf16.msra.mxu0 0
        %580 = vmatprep.subr.bf16.mxu0 0
        %581 = vmatpush1.bf16.msra.mxu0 0
        %582 = vmatprep.subr.bf16.mxu0 0
        %583 = vmatpush1.bf16.msra.mxu0 0
        %584 = vmatprep.subr.bf16.mxu0 0
        %585 = vmatpush1.bf16.msra.mxu0 0
        %586 = vmatprep.subr.bf16.mxu0 0
        %587 = vmatpush1.bf16.msra.mxu0 0
        %588 = vmatprep.subr.bf16.mxu0 0
        %589 = vmatpush1.bf16.msra.mxu0 0
        %590 = vmatprep.subr.bf16.mxu0 0
        %591 = vmatpush1.bf16.msra.mxu0 0
        %592 = vmatprep.subr.bf16.mxu0 0
        %593 = vmatpush1.bf16.msra.mxu0 0
        %594 = vmatprep.subr.bf16.mxu0 0
        %595 = vmatpush1.bf16.msra.mxu0 0
        %596 = vmatprep.subr.bf16.mxu0 0
        %597 = vmatpush1.bf16.msra.mxu0 0
        %598 = vmatprep.subr.bf16.mxu0 0
        %599 = vmatpush1.bf16.msra.mxu0 0
        %600 = vmatprep.subr.bf16.mxu0 0
        %601 = vmatpush1.bf16.msra.mxu0 0
        %602 = vmatprep.subr.bf16.mxu0 0
        %603 = vmatpush1.bf16.msra.mxu0 0
        %604 = vmatprep.mubr.bf16.mxu0 0
        %605 = vmatmul.mubr.bf16.gmra.mrb[0].mxu0 %v570
        %v606 = vpop.f32.mrb[0].mxu0
        %v607 = vadd.f32 0.0, %v606
        %v608 = vpop.f32.mrb[0].mxu0
        %v609 = vpop.f32.mrb[0].mxu0
        %v610 = vadd.f32 0.0, %v609
        %v611 = vpop.f32.mrb[0].mxu0
        %612 = vdwg.mxu0
        %v613 = vadd.f32 %v551, %v607
        %v614 = vadd.f32 %v552, %v610
        %s615 = scalar_lea.vmem %s2, 16
        %v616 = vld [vmem:[%s615] sm:$0xf]
        %v617 = vld [vmem:[%s615 + $0x4] sm:$0xf]
        %v618 = vsel %vm345, 1, 0
        %vm619 = vcmp.eq.s32.totalorder %v618, 1
        %vm620 = vmpackc.low %vm619, %vm619
        %v621 = vsel %vm620, 65537, 0
        %622 = vrot.lane.b32.xlu0 %v621, 2
        %v623 = vpop.permute.xlu0 %622
        %vm624 = vcmp.ne.s16.totalorder %v623, 0
        %v625 = vsel %vm624, %v348, 0
        %v626 = vsel %vm624, %v349, 0
        %v627 = vsel %vm624, %v350, 0
        %v628 = vsel %vm624, %v351, 0
        %v631 = vunpack.c.l.b16 %v616
        %v632 = vunpack.c.l.b16 %v617
        %v633 = vpack.c.b16 %v632, %v631
        %v638 = vunpack.c.l.b16 %v625
        %v639 = vunpack.c.l.b16 %v626
        %v640 = vunpack.c.l.b16 %v627
        %v641 = vunpack.c.l.b16 %v628
        %v642 = vpack.c.b16 %v639, %v638
        %v643 = vpack.c.b16 %v641, %v640
        %644 = vrot.lane.b32.xlu0 %v642, 126
        %v645 = vpop.permute.xlu0 %644
        %646 = vrot.lane.b32.xlu0 %v643, 126
        %v647 = vpop.permute.xlu0 %646
        %v651 = vsel %vm438, %v633, 0
        %653 = vmatprep.subr.bf16.mxu0 0
        %654 = vmatpush1.bf16.msra.mxu0 %v645
        %655 = vmatprep.subr.bf16.mxu0 0
        %656 = vmatpush1.bf16.msra.mxu0 %v647
        %657 = vmatprep.subr.bf16.mxu0 0
        %658 = vmatpush1.bf16.msra.mxu0 0
        %659 = vmatprep.subr.bf16.mxu0 0
        %660 = vmatpush1.bf16.msra.mxu0 0
        %661 = vmatprep.subr.bf16.mxu0 0
        %662 = vmatpush1.bf16.msra.mxu0 0
        %663 = vmatprep.subr.bf16.mxu0 0
        %664 = vmatpush1.bf16.msra.mxu0 0
        %665 = vmatprep.subr.bf16.mxu0 0
        %666 = vmatpush1.bf16.msra.mxu0 0
        %667 = vmatprep.subr.bf16.mxu0 0
        %668 = vmatpush1.bf16.msra.mxu0 0
        %669 = vmatprep.subr.bf16.mxu0 0
        %670 = vmatpush1.bf16.msra.mxu0 0
        %671 = vmatprep.subr.bf16.mxu0 0
        %672 = vmatpush1.bf16.msra.mxu0 0
        %673 = vmatprep.subr.bf16.mxu0 0
        %674 = vmatpush1.bf16.msra.mxu0 0
        %675 = vmatprep.subr.bf16.mxu0 0
        %676 = vmatpush1.bf16.msra.mxu0 0
        %677 = vmatprep.subr.bf16.mxu0 0
        %678 = vmatpush1.bf16.msra.mxu0 0
        %679 = vmatprep.subr.bf16.mxu0 0
        %680 = vmatpush1.bf16.msra.mxu0 0
        %681 = vmatprep.subr.bf16.mxu0 0
        %682 = vmatpush1.bf16.msra.mxu0 0
        %683 = vmatprep.subr.bf16.mxu0 0
        %684 = vmatpush1.bf16.msra.mxu0 0
        %685 = vmatprep.mubr.bf16.mxu0 0
        %686 = vmatmul.mubr.bf16.gmra.mrb[0].mxu0 %v651
        %v687 = vpop.f32.mrb[0].mxu0
        %v688 = vadd.f32 0.0, %v687
        %v689 = vpop.f32.mrb[0].mxu0
        %v690 = vpop.f32.mrb[0].mxu0
        %v691 = vadd.f32 0.0, %v690
        %v692 = vpop.f32.mrb[0].mxu0
        %693 = vdwg.mxu0
        %v694 = vadd.f32 %v613, %v688
        %v695 = vadd.f32 %v614, %v691
        %s696 = scalar_lea.vmem [#allocation3], 16
        %v697 = vld [vmem:[%s696] sm:$0xf]
        %v698 = vld [vmem:[%s696 + $0x4] sm:$0xf]
        %v699 = vsel %vm624, %v361, 0
        %v700 = vsel %vm624, %v362, 0
        %v703 = vunpack.c.l.b16 %v697
        %v704 = vunpack.c.l.b16 %v698
        %v705 = vpack.c.b16 %v704, %v703
        %v708 = vunpack.c.l.b16 %v699
        %v709 = vunpack.c.l.b16 %v700
        %v710 = vpack.c.b16 %v709, %v708
        %711 = vrot.lane.b32.xlu0 %v710, 126
        %v712 = vpop.permute.xlu0 %711
        %v715 = vsel %vm376, %v705, 0
        %717 = vmatprep.subr.bf16.mxu0 0
        %718 = vmatpush1.bf16.msra.mxu0 %v712
        %719 = vmatprep.subr.bf16.mxu0 0
        %720 = vmatpush1.bf16.msra.mxu0 0
        %721 = vmatprep.subr.bf16.mxu0 0
        %722 = vmatpush1.bf16.msra.mxu0 0
        %723 = vmatprep.subr.bf16.mxu0 0
        %724 = vmatpush1.bf16.msra.mxu0 0
        %725 = vmatprep.subr.bf16.mxu0 0
        %726 = vmatpush1.bf16.msra.mxu0 0
        %727 = vmatprep.subr.bf16.mxu0 0
        %728 = vmatpush1.bf16.msra.mxu0 0
        %729 = vmatprep.subr.bf16.mxu0 0
        %730 = vmatpush1.bf16.msra.mxu0 0
        %731 = vmatprep.subr.bf16.mxu0 0
        %732 = vmatpush1.bf16.msra.mxu0 0
        %733 = vmatprep.subr.bf16.mxu0 0
        %734 = vmatpush1.bf16.msra.mxu0 0
        %735 = vmatprep.subr.bf16.mxu0 0
        %736 = vmatpush1.bf16.msra.mxu0 0
        %737 = vmatprep.subr.bf16.mxu0 0
        %738 = vmatpush1.bf16.msra.mxu0 0
        %739 = vmatprep.subr.bf16.mxu0 0
        %740 = vmatpush1.bf16.msra.mxu0 0
        %741 = vmatprep.subr.bf16.mxu0 0
        %742 = vmatpush1.bf16.msra.mxu0 0
        %743 = vmatprep.subr.bf16.mxu0 0
        %744 = vmatpush1.bf16.msra.mxu0 0
        %745 = vmatprep.subr.bf16.mxu0 0
        %746 = vmatpush1.bf16.msra.mxu0 0
        %747 = vmatprep.subr.bf16.mxu0 0
        %748 = vmatpush1.bf16.msra.mxu0 0
        %749 = vmatprep.mubr.bf16.mxu0 0
        %750 = vmatmul.mubr.bf16.gmra.mrb[0].mxu0 %v715
        %v751 = vpop.f32.mrb[0].mxu0
        %v752 = vadd.f32 0.0, %v751
        %v753 = vpop.f32.mrb[0].mxu0
        %v754 = vpop.f32.mrb[0].mxu0
        %v755 = vadd.f32 0.0, %v754
        %v756 = vpop.f32.mrb[0].mxu0
        %757 = vdwg.mxu0
        %v758 = vadd.f32 %v694, %v752
        %v759 = vadd.f32 %v695, %v755
        %s760 = scalar_lea.vmem %s2, 24
        %v761 = vld [vmem:[%s760] sm:$0xf]
        %v762 = vld [vmem:[%s760 + $0x4] sm:$0xf]
        %v763 = vsel %vm354, 65537, 0
        %764 = vrot.lane.b32.xlu0 %v763, 4
        %v765 = vpop.permute.xlu0 %764
        %vm766 = vcmp.ne.s16.totalorder %v765, 0
        %v767 = vsel %vm766, %v348, 0
        %v768 = vsel %vm766, %v349, 0
        %v769 = vsel %vm766, %v350, 0
        %v770 = vsel %vm766, %v351, 0
        %v773 = vunpack.c.l.b16 %v761
        %v774 = vunpack.c.l.b16 %v762
        %v775 = vpack.c.b16 %v774, %v773
        %v780 = vunpack.c.l.b16 %v767
        %v781 = vunpack.c.l.b16 %v768
        %v782 = vunpack.c.l.b16 %v769
        %v783 = vunpack.c.l.b16 %v770
        %v784 = vpack.c.b16 %v781, %v780
        %v785 = vpack.c.b16 %v783, %v782
        %786 = vrot.lane.b32.xlu0 %v784, 124
        %v787 = vpop.permute.xlu0 %786
        %788 = vrot.lane.b32.xlu0 %v785, 124
        %v789 = vpop.permute.xlu0 %788
        %v793 = vsel %vm438, %v775, 0
        %795 = vmatprep.subr.bf16.mxu0 0
        %796 = vmatpush1.bf16.msra.mxu0 %v787
        %797 = vmatprep.subr.bf16.mxu0 0
        %798 = vmatpush1.bf16.msra.mxu0 %v789
        %799 = vmatprep.subr.bf16.mxu0 0
        %800 = vmatpush1.bf16.msra.mxu0 0
        %801 = vmatprep.subr.bf16.mxu0 0
        %802 = vmatpush1.bf16.msra.mxu0 0
        %803 = vmatprep.subr.bf16.mxu0 0
        %804 = vmatpush1.bf16.msra.mxu0 0
        %805 = vmatprep.subr.bf16.mxu0 0
        %806 = vmatpush1.bf16.msra.mxu0 0
        %807 = vmatprep.subr.bf16.mxu0 0
        %808 = vmatpush1.bf16.msra.mxu0 0
        %809 = vmatprep.subr.bf16.mxu0 0
        %810 = vmatpush1.bf16.msra.mxu0 0
        %811 = vmatprep.subr.bf16.mxu0 0
        %812 = vmatpush1.bf16.msra.mxu0 0
        %813 = vmatprep.subr.bf16.mxu0 0
        %814 = vmatpush1.bf16.msra.mxu0 0
        %815 = vmatprep.subr.bf16.mxu0 0
        %816 = vmatpush1.bf16.msra.mxu0 0
        %817 = vmatprep.subr.bf16.mxu0 0
        %818 = vmatpush1.bf16.msra.mxu0 0
        %819 = vmatprep.subr.bf16.mxu0 0
        %820 = vmatpush1.bf16.msra.mxu0 0
        %821 = vmatprep.subr.bf16.mxu0 0
        %822 = vmatpush1.bf16.msra.mxu0 0
        %823 = vmatprep.subr.bf16.mxu0 0
        %824 = vmatpush1.bf16.msra.mxu0 0
        %825 = vmatprep.subr.bf16.mxu0 0
        %826 = vmatpush1.bf16.msra.mxu0 0
        %827 = vmatprep.mubr.bf16.mxu0 0
        %828 = vmatmul.mubr.bf16.gmra.mrb[0].mxu0 %v793
        %v829 = vpop.f32.mrb[0].mxu0
        %v830 = vadd.f32 0.0, %v829
        %v831 = vpop.f32.mrb[0].mxu0
        %v832 = vpop.f32.mrb[0].mxu0
        %v833 = vadd.f32 0.0, %v832
        %v834 = vpop.f32.mrb[0].mxu0
        %835 = vdwg.mxu0
        %v836 = vadd.f32 %v758, %v830
        %v837 = vadd.f32 %v759, %v833
        %s838 = scalar_lea.vmem [#allocation3], 24
        %v839 = vld [vmem:[%s838] sm:$0xf]
        %v840 = vld [vmem:[%s838 + $0x4] sm:$0xf]
        %v841 = vsel %vm766, %v361, 0
        %v842 = vsel %vm766, %v362, 0
        %v845 = vunpack.c.l.b16 %v839
        %v846 = vunpack.c.l.b16 %v840
        %v847 = vpack.c.b16 %v846, %v845
        %v850 = vunpack.c.l.b16 %v841
        %v851 = vunpack.c.l.b16 %v842
        %v852 = vpack.c.b16 %v851, %v850
        %853 = vrot.lane.b32.xlu0 %v852, 124
        %v854 = vpop.permute.xlu0 %853
        %v857 = vsel %vm376, %v847, 0
        %859 = vmatprep.subr.bf16.mxu0 0
        %860 = vmatpush1.bf16.msra.mxu0 %v854
        %861 = vmatprep.subr.bf16.mxu0 0
        %862 = vmatpush1.bf16.msra.mxu0 0
        %863 = vmatprep.subr.bf16.mxu0 0
        %864 = vmatpush1.bf16.msra.mxu0 0
        %865 = vmatprep.subr.bf16.mxu0 0
        %866 = vmatpush1.bf16.msra.mxu0 0
        %867 = vmatprep.subr.bf16.mxu0 0
        %868 = vmatpush1.bf16.msra.mxu0 0
        %869 = vmatprep.subr.bf16.mxu0 0
        %870 = vmatpush1.bf16.msra.mxu0 0
        %871 = vmatprep.subr.bf16.mxu0 0
        %872 = vmatpush1.bf16.msra.mxu0 0
        %873 = vmatprep.subr.bf16.mxu0 0
        %874 = vmatpush1.bf16.msra.mxu0 0
        %875 = vmatprep.subr.bf16.mxu0 0
        %876 = vmatpush1.bf16.msra.mxu0 0
        %877 = vmatprep.subr.bf16.mxu0 0
        %878 = vmatpush1.bf16.msra.mxu0 0
        %879 = vmatprep.subr.bf16.mxu0 0
        %880 = vmatpush1.bf16.msra.mxu0 0
        %881 = vmatprep.subr.bf16.mxu0 0
        %882 = vmatpush1.bf16.msra.mxu0 0
        %883 = vmatprep.subr.bf16.mxu0 0
        %884 = vmatpush1.bf16.msra.mxu0 0
        %885 = vmatprep.subr.bf16.mxu0 0
        %886 = vmatpush1.bf16.msra.mxu0 0
        %887 = vmatprep.subr.bf16.mxu0 0
        %888 = vmatpush1.bf16.msra.mxu0 0
        %889 = vmatprep.subr.bf16.mxu0 0
        %890 = vmatpush1.bf16.msra.mxu0 0
        %891 = vmatprep.mubr.bf16.mxu0 0
        %892 = vmatmul.mubr.bf16.gmra.mrb[0].mxu0 %v857
        %v893 = vpop.f32.mrb[0].mxu0
        %v894 = vadd.f32 0.0, %v893
        %v895 = vpop.f32.mrb[0].mxu0
        %v896 = vpop.f32.mrb[0].mxu0
        %v897 = vadd.f32 0.0, %v896
        %v898 = vpop.f32.mrb[0].mxu0
        %899 = vdwg.mxu0
        %v900 = vadd.f32 %v836, %v894
        %v901 = vadd.f32 %v837, %v897
        %s902 = scalar_lea.vmem %s2, 32
        %v903 = vld [vmem:[%s902] sm:$0xf]
        %v904 = vld [vmem:[%s902 + $0x4] sm:$0xf]
        %v907 = vunpack.c.l.b16 %v903
        %v908 = vunpack.c.l.b16 %v904
        %v909 = vpack.c.b16 %v908, %v907
        %910 = vrot.lane.b32.xlu0 %v499, 123
        %v911 = vpop.permute.xlu0 %910
        %912 = vrot.lane.b32.xlu0 %v500, 123
        %v913 = vpop.permute.xlu0 %912
        %v917 = vsel %vm438, %v909, 0
        %919 = vmatprep.subr.bf16.mxu0 0
        %920 = vmatpush1.bf16.msra.mxu0 %v911
        %921 = vmatprep.subr.bf16.mxu0 0
        %922 = vmatpush1.bf16.msra.mxu0 %v913
        %923 = vmatprep.subr.bf16.mxu0 0
        %924 = vmatpush1.bf16.msra.mxu0 0
        %925 = vmatprep.subr.bf16.mxu0 0
        %926 = vmatpush1.bf16.msra.mxu0 0
        %927 = vmatprep.subr.bf16.mxu0 0
        %928 = vmatpush1.bf16.msra.mxu0 0
        %929 = vmatprep.subr.bf16.mxu0 0
        %930 = vmatpush1.bf16.msra.mxu0 0
        %931 = vmatprep.subr.bf16.mxu0 0
        %932 = vmatpush1.bf16.msra.mxu0 0
        %933 = vmatprep.subr.bf16.mxu0 0
        %934 = vmatpush1.bf16.msra.mxu0 0
        %935 = vmatprep.subr.bf16.mxu0 0
        %936 = vmatpush1.bf16.msra.mxu0 0
        %937 = vmatprep.subr.bf16.mxu0 0
        %938 = vmatpush1.bf16.msra.mxu0 0
        %939 = vmatprep.subr.bf16.mxu0 0
        %940 = vmatpush1.bf16.msra.mxu0 0
        %941 = vmatprep.subr.bf16.mxu0 0
        %942 = vmatpush1.bf16.msra.mxu0 0
        %943 = vmatprep.subr.bf16.mxu0 0
        %944 = vmatpush1.bf16.msra.mxu0 0
        %945 = vmatprep.subr.bf16.mxu0 0
        %946 = vmatpush1.bf16.msra.mxu0 0
        %947 = vmatprep.subr.bf16.mxu0 0
        %948 = vmatpush1.bf16.msra.mxu0 0
        %949 = vmatprep.subr.bf16.mxu0 0
        %950 = vmatpush1.bf16.msra.mxu0 0
        %951 = vmatprep.mubr.bf16.mxu0 0
        %952 = vmatmul.mubr.bf16.gmra.mrb[0].mxu0 %v917
        %v953 = vpop.f32.mrb[0].mxu0
        %v954 = vadd.f32 0.0, %v953
        %v955 = vpop.f32.mrb[0].mxu0
        %v956 = vpop.f32.mrb[0].mxu0
        %v957 = vadd.f32 0.0, %v956
        %v958 = vpop.f32.mrb[0].mxu0
        %959 = vdwg.mxu0
        %v960 = vadd.f32 %v900, %v954
        %v961 = vadd.f32 %v901, %v957
        %s962 = scalar_lea.vmem [#allocation3], 32
        %v963 = vld [vmem:[%s962] sm:$0xf]
        %v964 = vld [vmem:[%s962 + $0x4] sm:$0xf]
        %v967 = vunpack.c.l.b16 %v963
        %v968 = vunpack.c.l.b16 %v964
        %v969 = vpack.c.b16 %v968, %v967
        %970 = vrot.lane.b32.xlu0 %v565, 123
        %v971 = vpop.permute.xlu0 %970
        %v974 = vsel %vm376, %v969, 0
        %976 = vmatprep.subr.bf16.mxu0 0
        %977 = vmatpush1.bf16.msra.mxu0 %v971
        %978 = vmatprep.subr.bf16.mxu0 0
        %979 = vmatpush1.bf16.msra.mxu0 0
        %980 = vmatprep.subr.bf16.mxu0 0
        %981 = vmatpush1.bf16.msra.mxu0 0
        %982 = vmatprep.subr.bf16.mxu0 0
        %983 = vmatpush1.bf16.msra.mxu0 0
        %984 = vmatprep.subr.bf16.mxu0 0
        %985 = vmatpush1.bf16.msra.mxu0 0
        %986 = vmatprep.subr.bf16.mxu0 0
        %987 = vmatpush1.bf16.msra.mxu0 0
        %988 = vmatprep.subr.bf16.mxu0 0
        %989 = vmatpush1.bf16.msra.mxu0 0
        %990 = vmatprep.subr.bf16.mxu0 0
        %991 = vmatpush1.bf16.msra.mxu0 0
        %992 = vmatprep.subr.bf16.mxu0 0
        %993 = vmatpush1.bf16.msra.mxu0 0
        %994 = vmatprep.subr.bf16.mxu0 0
        %995 = vmatpush1.bf16.msra.mxu0 0
        %996 = vmatprep.subr.bf16.mxu0 0
        %997 = vmatpush1.bf16.msra.mxu0 0
        %998 = vmatprep.subr.bf16.mxu0 0
        %999 = vmatpush1.bf16.msra.mxu0 0
        %1000 = vmatprep.subr.bf16.mxu0 0
        %1001 = vmatpush1.bf16.msra.mxu0 0
        %1002 = vmatprep.subr.bf16.mxu0 0
        %1003 = vmatpush1.bf16.msra.mxu0 0
        %1004 = vmatprep.subr.bf16.mxu0 0
        %1005 = vmatpush1.bf16.msra.mxu0 0
        %1006 = vmatprep.subr.bf16.mxu0 0
        %1007 = vmatpush1.bf16.msra.mxu0 0
        %1008 = vmatprep.mubr.bf16.mxu0 0
        %1009 = vmatmul.mubr.bf16.gmra.mrb[0].mxu0 %v974
        %v1010 = vpop.f32.mrb[0].mxu0
        %v1011 = vadd.f32 0.0, %v1010
        %v1012 = vpop.f32.mrb[0].mxu0
        %v1013 = vpop.f32.mrb[0].mxu0
        %v1014 = vadd.f32 0.0, %v1013
        %v1015 = vpop.f32.mrb[0].mxu0
        %1016 = vdwg.mxu0
        %v1017 = vadd.f32 %v960, %v1011
        %v1018 = vadd.f32 %v961, %v1014
        %s1019 = scalar_lea.vmem %s2, 40
        %v1020 = vld [vmem:[%s1019] sm:$0xf]
        %v1021 = vld [vmem:[%s1019 + $0x4] sm:$0xf]
        %1022 = vrot.lane.b32.xlu0 %v621, 6
        %v1023 = vpop.permute.xlu0 %1022
        %vm1024 = vcmp.ne.s16.totalorder %v1023, 0
        %v1025 = vsel %vm1024, %v348, 0
        %v1026 = vsel %vm1024, %v349, 0
        %v1027 = vsel %vm1024, %v350, 0
        %v1028 = vsel %vm1024, %v351, 0
        %v1031 = vunpack.c.l.b16 %v1020
        %v1032 = vunpack.c.l.b16 %v1021
        %v1033 = vpack.c.b16 %v1032, %v1031
        %v1038 = vunpack.c.l.b16 %v1025
        %v1039 = vunpack.c.l.b16 %v1026
        %v1040 = vunpack.c.l.b16 %v1027
        %v1041 = vunpack.c.l.b16 %v1028
        %v1042 = vpack.c.b16 %v1039, %v1038
        %v1043 = vpack.c.b16 %v1041, %v1040
        %1044 = vrot.lane.b32.xlu0 %v1042, 122
        %v1045 = vpop.permute.xlu0 %1044
        %1046 = vrot.lane.b32.xlu0 %v1043, 122
        %v1047 = vpop.permute.xlu0 %1046
        %v1051 = vsel %vm438, %v1033, 0
        %1053 = vmatprep.subr.bf16.mxu0 0
        %1054 = vmatpush1.bf16.msra.mxu0 %v1045
        %1055 = vmatprep.subr.bf16.mxu0 0
        %1056 = vmatpush1.bf16.msra.mxu0 %v1047
        %1057 = vmatprep.subr.bf16.mxu0 0
        %1058 = vmatpush1.bf16.msra.mxu0 0
        %1059 = vmatprep.subr.bf16.mxu0 0
        %1060 = vmatpush1.bf16.msra.mxu0 0
        %1061 = vmatprep.subr.bf16.mxu0 0
        %1062 = vmatpush1.bf16.msra.mxu0 0
        %1063 = vmatprep.subr.bf16.mxu0 0
        %1064 = vmatpush1.bf16.msra.mxu0 0
        %1065 = vmatprep.subr.bf16.mxu0 0
        %1066 = vmatpush1.bf16.msra.mxu0 0
        %1067 = vmatprep.subr.bf16.mxu0 0
        %1068 = vmatpush1.bf16.msra.mxu0 0
        %1069 = vmatprep.subr.bf16.mxu0 0
        %1070 = vmatpush1.bf16.msra.mxu0 0
        %1071 = vmatprep.subr.bf16.mxu0 0
        %1072 = vmatpush1.bf16.msra.mxu0 0
        %1073 = vmatprep.subr.bf16.mxu0 0
        %1074 = vmatpush1.bf16.msra.mxu0 0
        %1075 = vmatprep.subr.bf16.mxu0 0
        %1076 = vmatpush1.bf16.msra.mxu0 0
        %1077 = vmatprep.subr.bf16.mxu0 0
        %1078 = vmatpush1.bf16.msra.mxu0 0
        %1079 = vmatprep.subr.bf16.mxu0 0
        %1080 = vmatpush1.bf16.msra.mxu0 0
        %1081 = vmatprep.subr.bf16.mxu0 0
        %1082 = vmatpush1.bf16.msra.mxu0 0
        %1083 = vmatprep.subr.bf16.mxu0 0
        %1084 = vmatpush1.bf16.msra.mxu0 0
        %1085 = vmatprep.mubr.bf16.mxu0 0
        %1086 = vmatmul.mubr.bf16.gmra.mrb[0].mxu0 %v1051
        %v1087 = vpop.f32.mrb[0].mxu0
        %v1088 = vadd.f32 0.0, %v1087
        %v1089 = vpop.f32.mrb[0].mxu0
        %v1090 = vpop.f32.mrb[0].mxu0
        %v1091 = vadd.f32 0.0, %v1090
        %v1092 = vpop.f32.mrb[0].mxu0
        %1093 = vdwg.mxu0
        %v1094 = vadd.f32 %v1017, %v1088
        %v1095 = vadd.f32 %v1018, %v1091
        %s1096 = scalar_lea.vmem [#allocation3], 40
        %v1097 = vld [vmem:[%s1096] sm:$0xf]
        %v1098 = vld [vmem:[%s1096 + $0x4] sm:$0xf]
        %v1099 = vsel %vm1024, %v361, 0
        %v1100 = vsel %vm1024, %v362, 0
        %v1103 = vunpack.c.l.b16 %v1097
        %v1104 = vunpack.c.l.b16 %v1098
        %v1105 = vpack.c.b16 %v1104, %v1103
        %v1108 = vunpack.c.l.b16 %v1099
        %v1109 = vunpack.c.l.b16 %v1100
        %v1110 = vpack.c.b16 %v1109, %v1108
        %1111 = vrot.lane.b32.xlu0 %v1110, 122
        %v1112 = vpop.permute.xlu0 %1111
        %v1115 = vsel %vm376, %v1105, 0
        %1117 = vmatprep.subr.bf16.mxu0 0
        %1118 = vmatpush1.bf16.msra.mxu0 %v1112
        %1119 = vmatprep.subr.bf16.mxu0 0
        %1120 = vmatpush1.bf16.msra.mxu0 0
        %1121 = vmatprep.subr.bf16.mxu0 0
        %1122 = vmatpush1.bf16.msra.mxu0 0
        %1123 = vmatprep.subr.bf16.mxu0 0
        %1124 = vmatpush1.bf16.msra.mxu0 0
        %1125 = vmatprep.subr.bf16.mxu0 0
        %1126 = vmatpush1.bf16.msra.mxu0 0
        %1127 = vmatprep.subr.bf16.mxu0 0
        %1128 = vmatpush1.bf16.msra.mxu0 0
        %1129 = vmatprep.subr.bf16.mxu0 0
        %1130 = vmatpush1.bf16.msra.mxu0 0
        %1131 = vmatprep.subr.bf16.mxu0 0
        %1132 = vmatpush1.bf16.msra.mxu0 0
        %1133 = vmatprep.subr.bf16.mxu0 0
        %1134 = vmatpush1.bf16.msra.mxu0 0
        %1135 = vmatprep.subr.bf16.mxu0 0
        %1136 = vmatpush1.bf16.msra.mxu0 0
        %1137 = vmatprep.subr.bf16.mxu0 0
        %1138 = vmatpush1.bf16.msra.mxu0 0
        %1139 = vmatprep.subr.bf16.mxu0 0
        %1140 = vmatpush1.bf16.msra.mxu0 0
        %1141 = vmatprep.subr.bf16.mxu0 0
        %1142 = vmatpush1.bf16.msra.mxu0 0
        %1143 = vmatprep.subr.bf16.mxu0 0
        %1144 = vmatpush1.bf16.msra.mxu0 0
        %1145 = vmatprep.subr.bf16.mxu0 0
        %1146 = vmatpush1.bf16.msra.mxu0 0
        %1147 = vmatprep.subr.bf16.mxu0 0
        %1148 = vmatpush1.bf16.msra.mxu0 0
        %1149 = vmatprep.mubr.bf16.mxu0 0
        %1150 = vmatmul.mubr.bf16.gmra.mrb[0].mxu0 %v1115
        %v1151 = vpop.f32.mrb[0].mxu0
        %v1152 = vadd.f32 0.0, %v1151
        %v1153 = vpop.f32.mrb[0].mxu0
        %v1154 = vpop.f32.mrb[0].mxu0
        %v1155 = vadd.f32 0.0, %v1154
        %v1156 = vpop.f32.mrb[0].mxu0
        %1157 = vdwg.mxu0
        %v1158 = vadd.f32 %v1094, %v1152
        %v1159 = vadd.f32 %v1095, %v1155
        %s1160 = scalar_lea.vmem %s2, 48
        %v1161 = vld [vmem:[%s1160] sm:$0xf]
        %v1162 = vld [vmem:[%s1160 + $0x4] sm:$0xf]
        %1163 = vrot.lane.b32.xlu0 %v763, 8
        %v1164 = vpop.permute.xlu0 %1163
        %vm1165 = vcmp.ne.s16.totalorder %v1164, 0
        %v1166 = vsel %vm1165, %v348, 0
        %v1167 = vsel %vm1165, %v349, 0
        %v1168 = vsel %vm1165, %v350, 0
        %v1169 = vsel %vm1165, %v351, 0
        %v1172 = vunpack.c.l.b16 %v1161
        %v1173 = vunpack.c.l.b16 %v1162
        %v1174 = vpack.c.b16 %v1173, %v1172
        %v1179 = vunpack.c.l.b16 %v1166
        %v1180 = vunpack.c.l.b16 %v1167
        %v1181 = vunpack.c.l.b16 %v1168
        %v1182 = vunpack.c.l.b16 %v1169
        %v1183 = vpack.c.b16 %v1180, %v1179
        %v1184 = vpack.c.b16 %v1182, %v1181
        %1185 = vrot.lane.b32.xlu0 %v1183, 120
        %v1186 = vpop.permute.xlu0 %1185
        %1187 = vrot.lane.b32.xlu0 %v1184, 120
        %v1188 = vpop.permute.xlu0 %1187
        %v1192 = vsel %vm438, %v1174, 0
        %1194 = vmatprep.subr.bf16.mxu0 0
        %1195 = vmatpush1.bf16.msra.mxu0 %v1186
        %1196 = vmatprep.subr.bf16.mxu0 0
        %1197 = vmatpush1.bf16.msra.mxu0 %v1188
        %1198 = vmatprep.subr.bf16.mxu0 0
        %1199 = vmatpush1.bf16.msra.mxu0 0
        %1200 = vmatprep.subr.bf16.mxu0 0
        %1201 = vmatpush1.bf16.msra.mxu0 0
        %1202 = vmatprep.subr.bf16.mxu0 0
        %1203 = vmatpush1.bf16.msra.mxu0 0
        %1204 = vmatprep.subr.bf16.mxu0 0
        %1205 = vmatpush1.bf16.msra.mxu0 0
        %1206 = vmatprep.subr.bf16.mxu0 0
        %1207 = vmatpush1.bf16.msra.mxu0 0
        %1208 = vmatprep.subr.bf16.mxu0 0
        %1209 = vmatpush1.bf16.msra.mxu0 0
        %1210 = vmatprep.subr.bf16.mxu0 0
        %1211 = vmatpush1.bf16.msra.mxu0 0
        %1212 = vmatprep.subr.bf16.mxu0 0
        %1213 = vmatpush1.bf16.msra.mxu0 0
        %1214 = vmatprep.subr.bf16.mxu0 0
        %1215 = vmatpush1.bf16.msra.mxu0 0
        %1216 = vmatprep.subr.bf16.mxu0 0
        %1217 = vmatpush1.bf16.msra.mxu0 0
        %1218 = vmatprep.subr.bf16.mxu0 0
        %1219 = vmatpush1.bf16.msra.mxu0 0
        %1220 = vmatprep.subr.bf16.mxu0 0
        %1221 = vmatpush1.bf16.msra.mxu0 0
        %1222 = vmatprep.subr.bf16.mxu0 0
        %1223 = vmatpush1.bf16.msra.mxu0 0
        %1224 = vmatprep.subr.bf16.mxu0 0
        %1225 = vmatpush1.bf16.msra.mxu0 0
        %1226 = vmatprep.mubr.bf16.mxu0 0
        %1227 = vmatmul.mubr.bf16.gmra.mrb[0].mxu0 %v1192
        %v1228 = vpop.f32.mrb[0].mxu0
        %v1229 = vadd.f32 0.0, %v1228
        %v1230 = vpop.f32.mrb[0].mxu0
        %v1231 = vpop.f32.mrb[0].mxu0
        %v1232 = vadd.f32 0.0, %v1231
        %v1233 = vpop.f32.mrb[0].mxu0
        %1234 = vdwg.mxu0
        %v1235 = vadd.f32 %v1158, %v1229
        %v1236 = vadd.f32 %v1159, %v1232
        %s1237 = scalar_lea.vmem [#allocation3], 48
        %v1238 = vld [vmem:[%s1237] sm:$0xf]
        %v1239 = vld [vmem:[%s1237 + $0x4] sm:$0xf]
        %v1240 = vsel %vm1165, %v361, 0
        %v1241 = vsel %vm1165, %v362, 0
        %v1244 = vunpack.c.l.b16 %v1238
        %v1245 = vunpack.c.l.b16 %v1239
        %v1246 = vpack.c.b16 %v1245, %v1244
        %v1249 = vunpack.c.l.b16 %v1240
        %v1250 = vunpack.c.l.b16 %v1241
        %v1251 = vpack.c.b16 %v1250, %v1249
        %1252 = vrot.lane.b32.xlu0 %v1251, 120
        %v1253 = vpop.permute.xlu0 %1252
        %v1256 = vsel %vm376, %v1246, 0
        %1258 = vmatprep.subr.bf16.mxu0 0
        %1259 = vmatpush1.bf16.msra.mxu0 %v1253
        %1260 = vmatprep.subr.bf16.mxu0 0
        %1261 = vmatpush1.bf16.msra.mxu0 0
        %1262 = vmatprep.subr.bf16.mxu0 0
        %1263 = vmatpush1.bf16.msra.mxu0 0
        %1264 = vmatprep.subr.bf16.mxu0 0
        %1265 = vmatpush1.bf16.msra.mxu0 0
        %1266 = vmatprep.subr.bf16.mxu0 0
        %1267 = vmatpush1.bf16.msra.mxu0 0
        %1268 = vmatprep.subr.bf16.mxu0 0
        %1269 = vmatpush1.bf16.msra.mxu0 0
        %1270 = vmatprep.subr.bf16.mxu0 0
        %1271 = vmatpush1.bf16.msra.mxu0 0
        %1272 = vmatprep.subr.bf16.mxu0 0
        %1273 = vmatpush1.bf16.msra.mxu0 0
        %1274 = vmatprep.subr.bf16.mxu0 0
        %1275 = vmatpush1.bf16.msra.mxu0 0
        %1276 = vmatprep.subr.bf16.mxu0 0
        %1277 = vmatpush1.bf16.msra.mxu0 0
        %1278 = vmatprep.subr.bf16.mxu0 0
        %1279 = vmatpush1.bf16.msra.mxu0 0
        %1280 = vmatprep.subr.bf16.mxu0 0
        %1281 = vmatpush1.bf16.msra.mxu0 0
        %1282 = vmatprep.subr.bf16.mxu0 0
        %1283 = vmatpush1.bf16.msra.mxu0 0
        %1284 = vmatprep.subr.bf16.mxu0 0
        %1285 = vmatpush1.bf16.msra.mxu0 0
        %1286 = vmatprep.subr.bf16.mxu0 0
        %1287 = vmatpush1.bf16.msra.mxu0 0
        %1288 = vmatprep.subr.bf16.mxu0 0
        %1289 = vmatpush1.bf16.msra.mxu0 0
        %1290 = vmatprep.mubr.bf16.mxu0 0
        %1291 = vmatmul.mubr.bf16.gmra.mrb[0].mxu0 %v1256
        %v1292 = vpop.f32.mrb[0].mxu0
        %v1293 = vadd.f32 0.0, %v1292
        %v1294 = vpop.f32.mrb[0].mxu0
        %v1295 = vpop.f32.mrb[0].mxu0
        %v1296 = vadd.f32 0.0, %v1295
        %v1297 = vpop.f32.mrb[0].mxu0
        %1298 = vdwg.mxu0
        %v1299 = vadd.f32 %v1235, %v1293
        %v1300 = vadd.f32 %v1236, %v1296
        %s1301 = scalar_lea.vmem %s2, 56
        %v1302 = vld [vmem:[%s1301] sm:$0xf]
        %v1303 = vld [vmem:[%s1301 + $0x4] sm:$0xf]
        %v1306 = vunpack.c.l.b16 %v1302
        %v1307 = vunpack.c.l.b16 %v1303
        %v1308 = vpack.c.b16 %v1307, %v1306
        %1309 = vrot.lane.b32.xlu0 %v499, 119
        %v1310 = vpop.permute.xlu0 %1309
        %1311 = vrot.lane.b32.xlu0 %v500, 119
        %v1312 = vpop.permute.xlu0 %1311
        %v1316 = vsel %vm438, %v1308, 0
        %1318 = vmatprep.subr.bf16.mxu0 0
        %1319 = vmatpush1.bf16.msra.mxu0 %v1310
        %1320 = vmatprep.subr.bf16.mxu0 0
        %1321 = vmatpush1.bf16.msra.mxu0 %v1312
        %1322 = vmatprep.subr.bf16.mxu0 0
        %1323 = vmatpush1.bf16.msra.mxu0 0
        %1324 = vmatprep.subr.bf16.mxu0 0
        %1325 = vmatpush1.bf16.msra.mxu0 0
        %1326 = vmatprep.subr.bf16.mxu0 0
        %1327 = vmatpush1.bf16.msra.mxu0 0
        %1328 = vmatprep.subr.bf16.mxu0 0
        %1329 = vmatpush1.bf16.msra.mxu0 0
        %1330 = vmatprep.subr.bf16.mxu0 0
        %1331 = vmatpush1.bf16.msra.mxu0 0
        %1332 = vmatprep.subr.bf16.mxu0 0
        %1333 = vmatpush1.bf16.msra.mxu0 0
        %1334 = vmatprep.subr.bf16.mxu0 0
        %1335 = vmatpush1.bf16.msra.mxu0 0
        %1336 = vmatprep.subr.bf16.mxu0 0
        %1337 = vmatpush1.bf16.msra.mxu0 0
        %1338 = vmatprep.subr.bf16.mxu0 0
        %1339 = vmatpush1.bf16.msra.mxu0 0
        %1340 = vmatprep.subr.bf16.mxu0 0
        %1341 = vmatpush1.bf16.msra.mxu0 0
        %1342 = vmatprep.subr.bf16.mxu0 0
        %1343 = vmatpush1.bf16.msra.mxu0 0
        %1344 = vmatprep.subr.bf16.mxu0 0
        %1345 = vmatpush1.bf16.msra.mxu0 0
        %1346 = vmatprep.subr.bf16.mxu0 0
        %1347 = vmatpush1.bf16.msra.mxu0 0
        %1348 = vmatprep.subr.bf16.mxu0 0
        %1349 = vmatpush1.bf16.msra.mxu0 0
        %1350 = vmatprep.mubr.bf16.mxu0 0
        %1351 = vmatmul.mubr.bf16.gmra.mrb[0].mxu0 %v1316
        %v1352 = vpop.f32.mrb[0].mxu0
        %v1353 = vadd.f32 0.0, %v1352
        %v1354 = vpop.f32.mrb[0].mxu0
        %v1355 = vpop.f32.mrb[0].mxu0
        %v1356 = vadd.f32 0.0, %v1355
        %v1357 = vpop.f32.mrb[0].mxu0
        %1358 = vdwg.mxu0
        %v1359 = vadd.f32 %v1299, %v1353
        %v1360 = vadd.f32 %v1300, %v1356
        %s1361 = scalar_lea.vmem [#allocation3], 56
        %v1362 = vld [vmem:[%s1361] sm:$0xf]
        %v1363 = vld [vmem:[%s1361 + $0x4] sm:$0xf]
        %v1366 = vunpack.c.l.b16 %v1362
        %v1367 = vunpack.c.l.b16 %v1363
        %v1368 = vpack.c.b16 %v1367, %v1366
        %1369 = vrot.lane.b32.xlu0 %v565, 119
        %v1370 = vpop.permute.xlu0 %1369
        %v1373 = vsel %vm376, %v1368, 0
        %1375 = vmatprep.subr.bf16.mxu0 0
        %1376 = vmatpush1.bf16.msra.mxu0 %v1370
        %1377 = vmatprep.subr.bf16.mxu0 0
        %1378 = vmatpush1.bf16.msra.mxu0 0
        %1379 = vmatprep.subr.bf16.mxu0 0
        %1380 = vmatpush1.bf16.msra.mxu0 0
        %1381 = vmatprep.subr.bf16.mxu0 0
        %1382 = vmatpush1.bf16.msra.mxu0 0
        %1383 = vmatprep.subr.bf16.mxu0 0
        %1384 = vmatpush1.bf16.msra.mxu0 0
        %1385 = vmatprep.subr.bf16.mxu0 0
        %1386 = vmatpush1.bf16.msra.mxu0 0
        %1387 = vmatprep.subr.bf16.mxu0 0
        %1388 = vmatpush1.bf16.msra.mxu0 0
        %1389 = vmatprep.subr.bf16.mxu0 0
        %1390 = vmatpush1.bf16.msra.mxu0 0
        %1391 = vmatprep.subr.bf16.mxu0 0
        %1392 = vmatpush1.bf16.msra.mxu0 0
        %1393 = vmatprep.subr.bf16.mxu0 0
        %1394 = vmatpush1.bf16.msra.mxu0 0
        %1395 = vmatprep.subr.bf16.mxu0 0
        %1396 = vmatpush1.bf16.msra.mxu0 0
        %1397 = vmatprep.subr.bf16.mxu0 0
        %1398 = vmatpush1.bf16.msra.mxu0 0
        %1399 = vmatprep.subr.bf16.mxu0 0
        %1400 = vmatpush1.bf16.msra.mxu0 0
        %1401 = vmatprep.subr.bf16.mxu0 0
        %1402 = vmatpush1.bf16.msra.mxu0 0
        %1403 = vmatprep.subr.bf16.mxu0 0
        %1404 = vmatpush1.bf16.msra.mxu0 0
        %1405 = vmatprep.subr.bf16.mxu0 0
        %1406 = vmatpush1.bf16.msra.mxu0 0
        %1407 = vmatprep.mubr.bf16.mxu0 0
        %1408 = vmatmul.mubr.bf16.gmra.mrb[0].mxu0 %v1373
        %v1409 = vpop.f32.mrb[0].mxu0
        %v1410 = vadd.f32 0.0, %v1409
        %v1411 = vpop.f32.mrb[0].mxu0
        %v1412 = vpop.f32.mrb[0].mxu0
        %v1413 = vadd.f32 0.0, %v1412
        %v1414 = vpop.f32.mrb[0].mxu0
        %1415 = vdwg.mxu0
        %v1416 = vadd.f32 %v1359, %v1410
        %v1417 = vadd.f32 %v1360, %v1413
        %s1418 = scalar_lea.vmem %s2, 64
        %v1419 = vld [vmem:[%s1418] sm:$0xf]
        %v1420 = vld [vmem:[%s1418 + $0x4] sm:$0xf]
        %1421 = vrot.lane.b32.xlu0 %v621, 10
        %v1422 = vpop.permute.xlu0 %1421
        %vm1423 = vcmp.ne.s16.totalorder %v1422, 0
        %v1424 = vsel %vm1423, %v348, 0
        %v1425 = vsel %vm1423, %v349, 0
        %v1426 = vsel %vm1423, %v350, 0
        %v1427 = vsel %vm1423, %v351, 0
        %v1430 = vunpack.c.l.b16 %v1419
        %v1431 = vunpack.c.l.b16 %v1420
        %v1432 = vpack.c.b16 %v1431, %v1430
        %v1437 = vunpack.c.l.b16 %v1424
        %v1438 = vunpack.c.l.b16 %v1425
        %v1439 = vunpack.c.l.b16 %v1426
        %v1440 = vunpack.c.l.b16 %v1427
        %v1441 = vpack.c.b16 %v1438, %v1437
        %v1442 = vpack.c.b16 %v1440, %v1439
        %1443 = vrot.lane.b32.xlu0 %v1441, 118
        %v1444 = vpop.permute.xlu0 %1443
        %1445 = vrot.lane.b32.xlu0 %v1442, 118
        %v1446 = vpop.permute.xlu0 %1445
        %v1450 = vsel %vm438, %v1432, 0
        %1452 = vmatprep.subr.bf16.mxu0 0
        %1453 = vmatpush1.bf16.msra.mxu0 %v1444
        %1454 = vmatprep.subr.bf16.mxu0 0
        %1455 = vmatpush1.bf16.msra.mxu0 %v1446
        %1456 = vmatprep.subr.bf16.mxu0 0
        %1457 = vmatpush1.bf16.msra.mxu0 0
        %1458 = vmatprep.subr.bf16.mxu0 0
        %1459 = vmatpush1.bf16.msra.mxu0 0
        %1460 = vmatprep.subr.bf16.mxu0 0
        %1461 = vmatpush1.bf16.msra.mxu0 0
        %1462 = vmatprep.subr.bf16.mxu0 0
        %1463 = vmatpush1.bf16.msra.mxu0 0
        %1464 = vmatprep.subr.bf16.mxu0 0
        %1465 = vmatpush1.bf16.msra.mxu0 0
        %1466 = vmatprep.subr.bf16.mxu0 0
        %1467 = vmatpush1.bf16.msra.mxu0 0
        %1468 = vmatprep.subr.bf16.mxu0 0
        %1469 = vmatpush1.bf16.msra.mxu0 0
        %1470 = vmatprep.subr.bf16.mxu0 0
        %1471 = vmatpush1.bf16.msra.mxu0 0
        %1472 = vmatprep.subr.bf16.mxu0 0
        %1473 = vmatpush1.bf16.msra.mxu0 0
        %1474 = vmatprep.subr.bf16.mxu0 0
        %1475 = vmatpush1.bf16.msra.mxu0 0
        %1476 = vmatprep.subr.bf16.mxu0 0
        %1477 = vmatpush1.bf16.msra.mxu0 0
        %1478 = vmatprep.subr.bf16.mxu0 0
        %1479 = vmatpush1.bf16.msra.mxu0 0
        %1480 = vmatprep.subr.bf16.mxu0 0
        %1481 = vmatpush1.bf16.msra.mxu0 0
        %1482 = vmatprep.subr.bf16.mxu0 0
        %1483 = vmatpush1.bf16.msra.mxu0 0
        %1484 = vmatprep.mubr.bf16.mxu0 0
        %1485 = vmatmul.mubr.bf16.gmra.mrb[0].mxu0 %v1450
        %v1486 = vpop.f32.mrb[0].mxu0
        %v1487 = vadd.f32 0.0, %v1486
        %v1488 = vpop.f32.mrb[0].mxu0
        %v1489 = vpop.f32.mrb[0].mxu0
        %v1490 = vadd.f32 0.0, %v1489
        %v1491 = vpop.f32.mrb[0].mxu0
        %1492 = vdwg.mxu0
        %v1493 = vadd.f32 %v1416, %v1487
        %v1494 = vadd.f32 %v1417, %v1490
        %s1495 = scalar_lea.vmem [#allocation3], 64
        %v1496 = vld [vmem:[%s1495] sm:$0xf]
        %v1497 = vld [vmem:[%s1495 + $0x4] sm:$0xf]
        %v1498 = vsel %vm1423, %v361, 0
        %v1499 = vsel %vm1423, %v362, 0
        %v1502 = vunpack.c.l.b16 %v1496
        %v1503 = vunpack.c.l.b16 %v1497
        %v1504 = vpack.c.b16 %v1503, %v1502
        %v1507 = vunpack.c.l.b16 %v1498
        %v1508 = vunpack.c.l.b16 %v1499
        %v1509 = vpack.c.b16 %v1508, %v1507
        %1510 = vrot.lane.b32.xlu0 %v1509, 118
        %v1511 = vpop.permute.xlu0 %1510
        %v1514 = vsel %vm376, %v1504, 0
        %1516 = vmatprep.subr.bf16.mxu0 0
        %1517 = vmatpush1.bf16.msra.mxu0 %v1511
        %1518 = vmatprep.subr.bf16.mxu0 0
        %1519 = vmatpush1.bf16.msra.mxu0 0
        %1520 = vmatprep.subr.bf16.mxu0 0
        %1521 = vmatpush1.bf16.msra.mxu0 0
        %1522 = vmatprep.subr.bf16.mxu0 0
        %1523 = vmatpush1.bf16.msra.mxu0 0
        %1524 = vmatprep.subr.bf16.mxu0 0
        %1525 = vmatpush1.bf16.msra.mxu0 0
        %1526 = vmatprep.subr.bf16.mxu0 0
        %1527 = vmatpush1.bf16.msra.mxu0 0
        %1528 = vmatprep.subr.bf16.mxu0 0
        %1529 = vmatpush1.bf16.msra.mxu0 0
        %1530 = vmatprep.subr.bf16.mxu0 0
        %1531 = vmatpush1.bf16.msra.mxu0 0
        %1532 = vmatprep.subr.bf16.mxu0 0
        %1533 = vmatpush1.bf16.msra.mxu0 0
        %1534 = vmatprep.subr.bf16.mxu0 0
        %1535 = vmatpush1.bf16.msra.mxu0 0
        %1536 = vmatprep.subr.bf16.mxu0 0
        %1537 = vmatpush1.bf16.msra.mxu0 0
        %1538 = vmatprep.subr.bf16.mxu0 0
        %1539 = vmatpush1.bf16.msra.mxu0 0
        %1540 = vmatprep.subr.bf16.mxu0 0
        %1541 = vmatpush1.bf16.msra.mxu0 0
        %1542 = vmatprep.subr.bf16.mxu0 0
        %1543 = vmatpush1.bf16.msra.mxu0 0
        %1544 = vmatprep.subr.bf16.mxu0 0
        %1545 = vmatpush1.bf16.msra.mxu0 0
        %1546 = vmatprep.subr.bf16.mxu0 0
        %1547 = vmatpush1.bf16.msra.mxu0 0
        %1548 = vmatprep.mubr.bf16.mxu0 0
        %1549 = vmatmul.mubr.bf16.gmra.mrb[0].mxu0 %v1514
        %v1550 = vpop.f32.mrb[0].mxu0
        %v1551 = vadd.f32 0.0, %v1550
        %v1552 = vpop.f32.mrb[0].mxu0
        %v1553 = vpop.f32.mrb[0].mxu0
        %v1554 = vadd.f32 0.0, %v1553
        %v1555 = vpop.f32.mrb[0].mxu0
        %1556 = vdwg.mxu0
        %v1557 = vadd.f32 %v1493, %v1551
        %v1558 = vadd.f32 %v1494, %v1554
        %v1559 = vld [vmem:[%s4] sm:$0xff]
        %v1560 = vld [vmem:[%s4 + $0x8] sm:$0xff]
        %1562 = vset.pattern.permute.xlu0 0
        %1563 = vperm.xlu0 %1562, %v1559
        %v1564 = vpop.permute.xlu0 %1563
        %1567 = vset.pattern.permute.xlu0 0
        %1568 = vperm.xlu0 %1567, %v1560
        %v1569 = vpop.permute.xlu0 %1568
        %v1571 = vadd.f32 %v1557, %v1564
        %v1572 = vadd.f32 %v1558, %v1569
        %v1573 = vmax.f32 %v1571, 0.0
        %v1574 = vmax.f32 %v1572, 0.0
        %vm1575 = vcmask 39936
        %1576 = vst.msk [vmem:[#allocation2] sm:$0xff] %vm1575, 0
        %vm1577 = vcmask 212136
        %1578 = vst.msk [vmem:[#allocation2] sm:$0xff] %vm1577, 0
        %v1579 = vpack.c.bf16 %v1574, %v1573
        %1581 = vrot.lane.b32.xlu0 %v1579, 5
        %v1582 = vpop.permute.xlu0 %1581
        %vm1584 = vcmask 171048
        %1585 = vst.msk [vmem:[#allocation2] sm:$0xff] %vm1584, %v1582
        %v1586 = vld [vmem:[#allocation6] sm:$0xf]
        %v1587 = vld [vmem:[#allocation6 + $0x4] sm:$0xf]
        %v1588 = vld [vmem:[#allocation2] sm:$0xff]
        %v1589 = vlaneseq
        %v1590 = vshrl.u32 %v1589, 7
        %v1591 = vsub.s32 0, %v1590
        %v1592 = vrot.slane %v763, %v1591
        %vm1593 = vcmp.ne.s16.totalorder %v1592, 0
        %v1594 = vsel %vm1593, %v1588, 0
        %s1595 = scalar_lea.vmem [#allocation6], 8
        %v1596 = vld [vmem:[%s1595] sm:$0xf]
        %v1597 = vld [vmem:[%s1595 + $0x4] sm:$0xf]
        %v1600 = vunpack.c.l.b16 %v1596
        %v1601 = vunpack.c.l.b16 %v1597
        %v1602 = vpack.c.b16 %v1601, %v1600
        %1604 = vrot.lane.b32.xlu0 %v1588, 127
        %v1605 = vpop.permute.xlu0 %1604
        %v1608 = vsel %vm376, %v1602, 0
        %1610 = vmatprep.subr.bf16.mxu0 0
        %1611 = vmatpush1.bf16.msra.mxu0 %v1605
        %1612 = vmatprep.subr.bf16.mxu0 0
        %1613 = vmatpush1.bf16.msra.mxu0 0
        %1614 = vmatprep.subr.bf16.mxu0 0
        %1615 = vmatpush1.bf16.msra.mxu0 0
        %1616 = vmatprep.subr.bf16.mxu0 0
        %1617 = vmatpush1.bf16.msra.mxu0 0
        %1618 = vmatprep.subr.bf16.mxu0 0
        %1619 = vmatpush1.bf16.msra.mxu0 0
        %1620 = vmatprep.subr.bf16.mxu0 0
        %1621 = vmatpush1.bf16.msra.mxu0 0
        %1622 = vmatprep.subr.bf16.mxu0 0
        %1623 = vmatpush1.bf16.msra.mxu0 0
        %1624 = vmatprep.subr.bf16.mxu0 0
        %1625 = vmatpush1.bf16.msra.mxu0 0
        %1626 = vmatprep.subr.bf16.mxu0 0
        %1627 = vmatpush1.bf16.msra.mxu0 0
        %1628 = vmatprep.subr.bf16.mxu0 0
        %1629 = vmatpush1.bf16.msra.mxu0 0
        %1630 = vmatprep.subr.bf16.mxu0 0
        %1631 = vmatpush1.bf16.msra.mxu0 0
        %1632 = vmatprep.subr.bf16.mxu0 0
        %1633 = vmatpush1.bf16.msra.mxu0 0
        %1634 = vmatprep.subr.bf16.mxu0 0
        %1635 = vmatpush1.bf16.msra.mxu0 0
        %1636 = vmatprep.subr.bf16.mxu0 0
        %1637 = vmatpush1.bf16.msra.mxu0 0
        %1638 = vmatprep.subr.bf16.mxu0 0
        %1639 = vmatpush1.bf16.msra.mxu0 0
        %1640 = vmatprep.subr.bf16.mxu0 0
        %1641 = vmatpush1.bf16.msra.mxu0 0
        %1642 = vmatprep.mubr.bf16.mxu0 0
        %1643 = vmatmul.mubr.bf16.gmra.mrb[0].mxu0 %v1608
        %v1644 = vpop.f32.mrb[0].mxu0
        %v1645 = vadd.f32 0.0, %v1644
        %v1646 = vpop.f32.mrb[0].mxu0
        %v1647 = vpop.f32.mrb[0].mxu0
        %v1648 = vadd.f32 0.0, %v1647
        %v1649 = vpop.f32.mrb[0].mxu0
        %1650 = vdwg.mxu0
        %v1653 = vunpack.c.l.b16 %v1586
        %v1654 = vunpack.c.l.b16 %v1587
        %v1655 = vpack.c.b16 %v1654, %v1653
        %v1657 = vsel %vm376, %v1655, 0
        %1659 = vmatprep.subr.bf16.mxu0 0
        %1660 = vmatpush1.bf16.msra.mxu0 %v1594
        %1661 = vmatprep.subr.bf16.mxu0 0
        %1662 = vmatpush1.bf16.msra.mxu0 0
        %1663 = vmatprep.subr.bf16.mxu0 0
        %1664 = vmatpush1.bf16.msra.mxu0 0
        %1665 = vmatprep.subr.bf16.mxu0 0
        %1666 = vmatpush1.bf16.msra.mxu0 0
        %1667 = vmatprep.subr.bf16.mxu0 0
        %1668 = vmatpush1.bf16.msra.mxu0 0
        %1669 = vmatprep.subr.bf16.mxu0 0
        %1670 = vmatpush1.bf16.msra.mxu0 0
        %1671 = vmatprep.subr.bf16.mxu0 0
        %1672 = vmatpush1.bf16.msra.mxu0 0
        %1673 = vmatprep.subr.bf16.mxu0 0
        %1674 = vmatpush1.bf16.msra.mxu0 0
        %1675 = vmatprep.subr.bf16.mxu0 0
        %1676 = vmatpush1.bf16.msra.mxu0 0
        %1677 = vmatprep.subr.bf16.mxu0 0
        %1678 = vmatpush1.bf16.msra.mxu0 0
        %1679 = vmatprep.subr.bf16.mxu0 0
        %1680 = vmatpush1.bf16.msra.mxu0 0
        %1681 = vmatprep.subr.bf16.mxu0 0
        %1682 = vmatpush1.bf16.msra.mxu0 0
        %1683 = vmatprep.subr.bf16.mxu0 0
        %1684 = vmatpush1.bf16.msra.mxu0 0
        %1685 = vmatprep.subr.bf16.mxu0 0
        %1686 = vmatpush1.bf16.msra.mxu0 0
        %1687 = vmatprep.subr.bf16.mxu0 0
        %1688 = vmatpush1.bf16.msra.mxu0 0
        %1689 = vmatprep.subr.bf16.mxu0 0
        %1690 = vmatpush1.bf16.msra.mxu0 0
        %1691 = vmatprep.mubr.bf16.mxu0 0
        %1692 = vmatmul.mubr.bf16.gmra.mrb[0].mxu0 %v1657
        %v1693 = vpop.f32.mrb[0].mxu0
        %v1694 = vadd.f32 %v1645, %v1693
        %v1695 = vpop.f32.mrb[0].mxu0
        %v1696 = vpop.f32.mrb[0].mxu0
        %v1697 = vadd.f32 %v1648, %v1696
        %v1698 = vpop.f32.mrb[0].mxu0
        %1699 = vdwg.mxu0
        %s1700 = scalar_lea.vmem [#allocation6], 16
        %v1701 = vld [vmem:[%s1700] sm:$0xf]
        %v1702 = vld [vmem:[%s1700 + $0x4] sm:$0xf]
        %v1703 = vlaneseq
        %v1704 = vshrl.u32 %v1703, 7
        %v1705 = vsub.s32 0, %v1704
        %v1706 = vrot.slane %v621, %v1705
        %1707 = vrot.lane.b32.xlu0 %v1706, 2
        %v1708 = vpop.permute.xlu0 %1707
        %vm1709 = vcmp.ne.s16.totalorder %v1708, 0
        %v1710 = vsel %vm1709, %v1588, 0
        %v1713 = vunpack.c.l.b16 %v1701
        %v1714 = vunpack.c.l.b16 %v1702
        %v1715 = vpack.c.b16 %v1714, %v1713
        %1717 = vrot.lane.b32.xlu0 %v1710, 126
        %v1718 = vpop.permute.xlu0 %1717
        %v1721 = vsel %vm376, %v1715, 0
        %1723 = vmatprep.subr.bf16.mxu0 0
        %1724 = vmatpush1.bf16.msra.mxu0 %v1718
        %1725 = vmatprep.subr.bf16.mxu0 0
        %1726 = vmatpush1.bf16.msra.mxu0 0
        %1727 = vmatprep.subr.bf16.mxu0 0
        %1728 = vmatpush1.bf16.msra.mxu0 0
        %1729 = vmatprep.subr.bf16.mxu0 0
        %1730 = vmatpush1.bf16.msra.mxu0 0
        %1731 = vmatprep.subr.bf16.mxu0 0
        %1732 = vmatpush1.bf16.msra.mxu0 0
        %1733 = vmatprep.subr.bf16.mxu0 0
        %1734 = vmatpush1.bf16.msra.mxu0 0
        %1735 = vmatprep.subr.bf16.mxu0 0
        %1736 = vmatpush1.bf16.msra.mxu0 0
        %1737 = vmatprep.subr.bf16.mxu0 0
        %1738 = vmatpush1.bf16.msra.mxu0 0
        %1739 = vmatprep.subr.bf16.mxu0 0
        %1740 = vmatpush1.bf16.msra.mxu0 0
        %1741 = vmatprep.subr.bf16.mxu0 0
        %1742 = vmatpush1.bf16.msra.mxu0 0
        %1743 = vmatprep.subr.bf16.mxu0 0
        %1744 = vmatpush1.bf16.msra.mxu0 0
        %1745 = vmatprep.subr.bf16.mxu0 0
        %1746 = vmatpush1.bf16.msra.mxu0 0
        %1747 = vmatprep.subr.bf16.mxu0 0
        %1748 = vmatpush1.bf16.msra.mxu0 0
        %1749 = vmatprep.subr.bf16.mxu0 0
        %1750 = vmatpush1.bf16.msra.mxu0 0
        %1751 = vmatprep.subr.bf16.mxu0 0
        %1752 = vmatpush1.bf16.msra.mxu0 0
        %1753 = vmatprep.subr.bf16.mxu0 0
        %1754 = vmatpush1.bf16.msra.mxu0 0
        %1755 = vmatprep.mubr.bf16.mxu0 0
        %1756 = vmatmul.mubr.bf16.gmra.mrb[0].mxu0 %v1721
        %v1757 = vpop.f32.mrb[0].mxu0
        %v1758 = vadd.f32 0.0, %v1757
        %v1759 = vpop.f32.mrb[0].mxu0
        %v1760 = vpop.f32.mrb[0].mxu0
        %v1761 = vadd.f32 0.0, %v1760
        %v1762 = vpop.f32.mrb[0].mxu0
        %1763 = vdwg.mxu0
        %v1764 = vadd.f32 %v1694, %v1758
        %v1765 = vadd.f32 %v1697, %v1761
        %s1766 = scalar_lea.vmem [#allocation6], 24
        %v1767 = vld [vmem:[%s1766] sm:$0xf]
        %v1768 = vld [vmem:[%s1766 + $0x4] sm:$0xf]
        %1769 = vrot.lane.b32.xlu0 %v1592, 4
        %v1770 = vpop.permute.xlu0 %1769
        %vm1771 = vcmp.ne.s16.totalorder %v1770, 0
        %v1772 = vsel %vm1771, %v1588, 0
        %v1775 = vunpack.c.l.b16 %v1767
        %v1776 = vunpack.c.l.b16 %v1768
        %v1777 = vpack.c.b16 %v1776, %v1775
        %1779 = vrot.lane.b32.xlu0 %v1772, 124
        %v1780 = vpop.permute.xlu0 %1779
        %v1783 = vsel %vm376, %v1777, 0
        %1785 = vmatprep.subr.bf16.mxu0 0
        %1786 = vmatpush1.bf16.msra.mxu0 %v1780
        %1787 = vmatprep.subr.bf16.mxu0 0
        %1788 = vmatpush1.bf16.msra.mxu0 0
        %1789 = vmatprep.subr.bf16.mxu0 0
        %1790 = vmatpush1.bf16.msra.mxu0 0
        %1791 = vmatprep.subr.bf16.mxu0 0
        %1792 = vmatpush1.bf16.msra.mxu0 0
        %1793 = vmatprep.subr.bf16.mxu0 0
        %1794 = vmatpush1.bf16.msra.mxu0 0
        %1795 = vmatprep.subr.bf16.mxu0 0
        %1796 = vmatpush1.bf16.msra.mxu0 0
        %1797 = vmatprep.subr.bf16.mxu0 0
        %1798 = vmatpush1.bf16.msra.mxu0 0
        %1799 = vmatprep.subr.bf16.mxu0 0
        %1800 = vmatpush1.bf16.msra.mxu0 0
        %1801 = vmatprep.subr.bf16.mxu0 0
        %1802 = vmatpush1.bf16.msra.mxu0 0
        %1803 = vmatprep.subr.bf16.mxu0 0
        %1804 = vmatpush1.bf16.msra.mxu0 0
        %1805 = vmatprep.subr.bf16.mxu0 0
        %1806 = vmatpush1.bf16.msra.mxu0 0
        %1807 = vmatprep.subr.bf16.mxu0 0
        %1808 = vmatpush1.bf16.msra.mxu0 0
        %1809 = vmatprep.subr.bf16.mxu0 0
        %1810 = vmatpush1.bf16.msra.mxu0 0
        %1811 = vmatprep.subr.bf16.mxu0 0
        %1812 = vmatpush1.bf16.msra.mxu0 0
        %1813 = vmatprep.subr.bf16.mxu0 0
        %1814 = vmatpush1.bf16.msra.mxu0 0
        %1815 = vmatprep.subr.bf16.mxu0 0
        %1816 = vmatpush1.bf16.msra.mxu0 0
        %1817 = vmatprep.mubr.bf16.mxu0 0
        %1818 = vmatmul.mubr.bf16.gmra.mrb[0].mxu0 %v1783
        %v1819 = vpop.f32.mrb[0].mxu0
        %v1820 = vadd.f32 0.0, %v1819
        %v1821 = vpop.f32.mrb[0].mxu0
        %v1822 = vpop.f32.mrb[0].mxu0
        %v1823 = vadd.f32 0.0, %v1822
        %v1824 = vpop.f32.mrb[0].mxu0
        %1825 = vdwg.mxu0
        %v1826 = vadd.f32 %v1764, %v1820
        %v1827 = vadd.f32 %v1765, %v1823
        %s1828 = scalar_lea.vmem [#allocation6], 32
        %v1829 = vld [vmem:[%s1828] sm:$0xf]
        %v1830 = vld [vmem:[%s1828 + $0x4] sm:$0xf]
        %v1833 = vunpack.c.l.b16 %v1829
        %v1834 = vunpack.c.l.b16 %v1830
        %v1835 = vpack.c.b16 %v1834, %v1833
        %1836 = vrot.lane.b32.xlu0 %v1588, 123
        %v1837 = vpop.permute.xlu0 %1836
        %v1840 = vsel %vm376, %v1835, 0
        %1842 = vmatprep.subr.bf16.mxu0 0
        %1843 = vmatpush1.bf16.msra.mxu0 %v1837
        %1844 = vmatprep.subr.bf16.mxu0 0
        %1845 = vmatpush1.bf16.msra.mxu0 0
        %1846 = vmatprep.subr.bf16.mxu0 0
        %1847 = vmatpush1.bf16.msra.mxu0 0
        %1848 = vmatprep.subr.bf16.mxu0 0
        %1849 = vmatpush1.bf16.msra.mxu0 0
        %1850 = vmatprep.subr.bf16.mxu0 0
        %1851 = vmatpush1.bf16.msra.mxu0 0
        %1852 = vmatprep.subr.bf16.mxu0 0
        %1853 = vmatpush1.bf16.msra.mxu0 0
        %1854 = vmatprep.subr.bf16.mxu0 0
        %1855 = vmatpush1.bf16.msra.mxu0 0
        %1856 = vmatprep.subr.bf16.mxu0 0
        %1857 = vmatpush1.bf16.msra.mxu0 0
        %1858 = vmatprep.subr.bf16.mxu0 0
        %1859 = vmatpush1.bf16.msra.mxu0 0
        %1860 = vmatprep.subr.bf16.mxu0 0
        %1861 = vmatpush1.bf16.msra.mxu0 0
        %1862 = vmatprep.subr.bf16.mxu0 0
        %1863 = vmatpush1.bf16.msra.mxu0 0
        %1864 = vmatprep.subr.bf16.mxu0 0
        %1865 = vmatpush1.bf16.msra.mxu0 0
        %1866 = vmatprep.subr.bf16.mxu0 0
        %1867 = vmatpush1.bf16.msra.mxu0 0
        %1868 = vmatprep.subr.bf16.mxu0 0
        %1869 = vmatpush1.bf16.msra.mxu0 0
        %1870 = vmatprep.subr.bf16.mxu0 0
        %1871 = vmatpush1.bf16.msra.mxu0 0
        %1872 = vmatprep.subr.bf16.mxu0 0
        %1873 = vmatpush1.bf16.msra.mxu0 0
        %1874 = vmatprep.mubr.bf16.mxu0 0
        %1875 = vmatmul.mubr.bf16.gmra.mrb[0].mxu0 %v1840
        %v1876 = vpop.f32.mrb[0].mxu0
        %v1877 = vadd.f32 0.0, %v1876
        %v1878 = vpop.f32.mrb[0].mxu0
        %v1879 = vpop.f32.mrb[0].mxu0
        %v1880 = vadd.f32 0.0, %v1879
        %v1881 = vpop.f32.mrb[0].mxu0
        %1882 = vdwg.mxu0
        %v1883 = vadd.f32 %v1826, %v1877
        %v1884 = vadd.f32 %v1827, %v1880
        %s1885 = scalar_lea.vmem [#allocation6], 40
        %v1886 = vld [vmem:[%s1885] sm:$0xf]
        %v1887 = vld [vmem:[%s1885 + $0x4] sm:$0xf]
        %1888 = vrot.lane.b32.xlu0 %v1706, 6
        %v1889 = vpop.permute.xlu0 %1888
        %vm1890 = vcmp.ne.s16.totalorder %v1889, 0
        %v1891 = vsel %vm1890, %v1588, 0
        %v1894 = vunpack.c.l.b16 %v1886
        %v1895 = vunpack.c.l.b16 %v1887
        %v1896 = vpack.c.b16 %v1895, %v1894
        %1898 = vrot.lane.b32.xlu0 %v1891, 122
        %v1899 = vpop.permute.xlu0 %1898
        %v1902 = vsel %vm376, %v1896, 0
        %1904 = vmatprep.subr.bf16.mxu0 0
        %1905 = vmatpush1.bf16.msra.mxu0 %v1899
        %1906 = vmatprep.subr.bf16.mxu0 0
        %1907 = vmatpush1.bf16.msra.mxu0 0
        %1908 = vmatprep.subr.bf16.mxu0 0
        %1909 = vmatpush1.bf16.msra.mxu0 0
        %1910 = vmatprep.subr.bf16.mxu0 0
        %1911 = vmatpush1.bf16.msra.mxu0 0
        %1912 = vmatprep.subr.bf16.mxu0 0
        %1913 = vmatpush1.bf16.msra.mxu0 0
        %1914 = vmatprep.subr.bf16.mxu0 0
        %1915 = vmatpush1.bf16.msra.mxu0 0
        %1916 = vmatprep.subr.bf16.mxu0 0
        %1917 = vmatpush1.bf16.msra.mxu0 0
        %1918 = vmatprep.subr.bf16.mxu0 0
        %1919 = vmatpush1.bf16.msra.mxu0 0
        %1920 = vmatprep.subr.bf16.mxu0 0
        %1921 = vmatpush1.bf16.msra.mxu0 0
        %1922 = vmatprep.subr.bf16.mxu0 0
        %1923 = vmatpush1.bf16.msra.mxu0 0
        %1924 = vmatprep.subr.bf16.mxu0 0
        %1925 = vmatpush1.bf16.msra.mxu0 0
        %1926 = vmatprep.subr.bf16.mxu0 0
        %1927 = vmatpush1.bf16.msra.mxu0 0
        %1928 = vmatprep.subr.bf16.mxu0 0
        %1929 = vmatpush1.bf16.msra.mxu0 0
        %1930 = vmatprep.subr.bf16.mxu0 0
        %1931 = vmatpush1.bf16.msra.mxu0 0
        %1932 = vmatprep.subr.bf16.mxu0 0
        %1933 = vmatpush1.bf16.msra.mxu0 0
        %1934 = vmatprep.subr.bf16.mxu0 0
        %1935 = vmatpush1.bf16.msra.mxu0 0
        %1936 = vmatprep.mubr.bf16.mxu0 0
        %1937 = vmatmul.mubr.bf16.gmra.mrb[0].mxu0 %v1902
        %v1938 = vpop.f32.mrb[0].mxu0
        %v1939 = vadd.f32 0.0, %v1938
        %v1940 = vpop.f32.mrb[0].mxu0
        %v1941 = vpop.f32.mrb[0].mxu0
        %v1942 = vadd.f32 0.0, %v1941
        %v1943 = vpop.f32.mrb[0].mxu0
        %1944 = vdwg.mxu0
        %v1945 = vadd.f32 %v1883, %v1939
        %v1946 = vadd.f32 %v1884, %v1942
        %s1947 = scalar_lea.vmem [#allocation6], 48
        %v1948 = vld [vmem:[%s1947] sm:$0xf]
        %v1949 = vld [vmem:[%s1947 + $0x4] sm:$0xf]
        %1950 = vrot.lane.b32.xlu0 %v1592, 8
        %v1951 = vpop.permute.xlu0 %1950
        %vm1952 = vcmp.ne.s16.totalorder %v1951, 0
        %v1953 = vsel %vm1952, %v1588, 0
        %v1956 = vunpack.c.l.b16 %v1948
        %v1957 = vunpack.c.l.b16 %v1949
        %v1958 = vpack.c.b16 %v1957, %v1956
        %1960 = vrot.lane.b32.xlu0 %v1953, 120
        %v1961 = vpop.permute.xlu0 %1960
        %v1964 = vsel %vm376, %v1958, 0
        %1966 = vmatprep.subr.bf16.mxu0 0
        %1967 = vmatpush1.bf16.msra.mxu0 %v1961
        %1968 = vmatprep.subr.bf16.mxu0 0
        %1969 = vmatpush1.bf16.msra.mxu0 0
        %1970 = vmatprep.subr.bf16.mxu0 0
        %1971 = vmatpush1.bf16.msra.mxu0 0
        %1972 = vmatprep.subr.bf16.mxu0 0
        %1973 = vmatpush1.bf16.msra.mxu0 0
        %1974 = vmatprep.subr.bf16.mxu0 0
        %1975 = vmatpush1.bf16.msra.mxu0 0
        %1976 = vmatprep.subr.bf16.mxu0 0
        %1977 = vmatpush1.bf16.msra.mxu0 0
        %1978 = vmatprep.subr.bf16.mxu0 0
        %1979 = vmatpush1.bf16.msra.mxu0 0
        %1980 = vmatprep.subr.bf16.mxu0 0
        %1981 = vmatpush1.bf16.msra.mxu0 0
        %1982 = vmatprep.subr.bf16.mxu0 0
        %1983 = vmatpush1.bf16.msra.mxu0 0
        %1984 = vmatprep.subr.bf16.mxu0 0
        %1985 = vmatpush1.bf16.msra.mxu0 0
        %1986 = vmatprep.subr.bf16.mxu0 0
        %1987 = vmatpush1.bf16.msra.mxu0 0
        %1988 = vmatprep.subr.bf16.mxu0 0
        %1989 = vmatpush1.bf16.msra.mxu0 0
        %1990 = vmatprep.subr.bf16.mxu0 0
        %1991 = vmatpush1.bf16.msra.mxu0 0
        %1992 = vmatprep.subr.bf16.mxu0 0
        %1993 = vmatpush1.bf16.msra.mxu0 0
        %1994 = vmatprep.subr.bf16.mxu0 0
        %1995 = vmatpush1.bf16.msra.mxu0 0
        %1996 = vmatprep.subr.bf16.mxu0 0
        %1997 = vmatpush1.bf16.msra.mxu0 0
        %1998 = vmatprep.mubr.bf16.mxu0 0
        %1999 = vmatmul.mubr.bf16.gmra.mrb[0].mxu0 %v1964
        %v2000 = vpop.f32.mrb[0].mxu0
        %v2001 = vadd.f32 0.0, %v2000
        %v2002 = vpop.f32.mrb[0].mxu0
        %v2003 = vpop.f32.mrb[0].mxu0
        %v2004 = vadd.f32 0.0, %v2003
        %v2005 = vpop.f32.mrb[0].mxu0
        %2006 = vdwg.mxu0
        %v2007 = vadd.f32 %v1945, %v2001
        %v2008 = vadd.f32 %v1946, %v2004
        %s2009 = scalar_lea.vmem [#allocation6], 56
        %v2010 = vld [vmem:[%s2009] sm:$0xf]
        %v2011 = vld [vmem:[%s2009 + $0x4] sm:$0xf]
        %v2014 = vunpack.c.l.b16 %v2010
        %v2015 = vunpack.c.l.b16 %v2011
        %v2016 = vpack.c.b16 %v2015, %v2014
        %2017 = vrot.lane.b32.xlu0 %v1588, 119
        %v2018 = vpop.permute.xlu0 %2017
        %v2021 = vsel %vm376, %v2016, 0
        %2023 = vmatprep.subr.bf16.mxu0 0
        %2024 = vmatpush1.bf16.msra.mxu0 %v2018
        %2025 = vmatprep.subr.bf16.mxu0 0
        %2026 = vmatpush1.bf16.msra.mxu0 0
        %2027 = vmatprep.subr.bf16.mxu0 0
        %2028 = vmatpush1.bf16.msra.mxu0 0
        %2029 = vmatprep.subr.bf16.mxu0 0
        %2030 = vmatpush1.bf16.msra.mxu0 0
        %2031 = vmatprep.subr.bf16.mxu0 0
        %2032 = vmatpush1.bf16.msra.mxu0 0
        %2033 = vmatprep.subr.bf16.mxu0 0
        %2034 = vmatpush1.bf16.msra.mxu0 0
        %2035 = vmatprep.subr.bf16.mxu0 0
        %2036 = vmatpush1.bf16.msra.mxu0 0
        %2037 = vmatprep.subr.bf16.mxu0 0
        %2038 = vmatpush1.bf16.msra.mxu0 0
        %2039 = vmatprep.subr.bf16.mxu0 0
        %2040 = vmatpush1.bf16.msra.mxu0 0
        %2041 = vmatprep.subr.bf16.mxu0 0
        %2042 = vmatpush1.bf16.msra.mxu0 0
        %2043 = vmatprep.subr.bf16.mxu0 0
        %2044 = vmatpush1.bf16.msra.mxu0 0
        %2045 = vmatprep.subr.bf16.mxu0 0
        %2046 = vmatpush1.bf16.msra.mxu0 0
        %2047 = vmatprep.subr.bf16.mxu0 0
        %2048 = vmatpush1.bf16.msra.mxu0 0
        %2049 = vmatprep.subr.bf16.mxu0 0
        %2050 = vmatpush1.bf16.msra.mxu0 0
        %2051 = vmatprep.subr.bf16.mxu0 0
        %2052 = vmatpush1.bf16.msra.mxu0 0
        %2053 = vmatprep.subr.bf16.mxu0 0
        %2054 = vmatpush1.bf16.msra.mxu0 0
        %2055 = vmatprep.mubr.bf16.mxu0 0
        %2056 = vmatmul.mubr.bf16.gmra.mrb[0].mxu0 %v2021
        %v2057 = vpop.f32.mrb[0].mxu0
        %v2058 = vadd.f32 0.0, %v2057
        %v2059 = vpop.f32.mrb[0].mxu0
        %v2060 = vpop.f32.mrb[0].mxu0
        %v2061 = vadd.f32 0.0, %v2060
        %v2062 = vpop.f32.mrb[0].mxu0
        %2063 = vdwg.mxu0
        %v2064 = vadd.f32 %v2007, %v2058
        %v2065 = vadd.f32 %v2008, %v2061
        %s2066 = scalar_lea.vmem [#allocation6], 64
        %v2067 = vld [vmem:[%s2066] sm:$0xf]
        %v2068 = vld [vmem:[%s2066 + $0x4] sm:$0xf]
        %2069 = vrot.lane.b32.xlu0 %v1706, 10
        %v2070 = vpop.permute.xlu0 %2069
        %vm2071 = vcmp.ne.s16.totalorder %v2070, 0
        %v2072 = vsel %vm2071, %v1588, 0
        %v2075 = vunpack.c.l.b16 %v2067
        %v2076 = vunpack.c.l.b16 %v2068
        %v2077 = vpack.c.b16 %v2076, %v2075
        %2079 = vrot.lane.b32.xlu0 %v2072, 118
        %v2080 = vpop.permute.xlu0 %2079
        %v2083 = vsel %vm376, %v2077, 0
        %2085 = vmatprep.subr.bf16.mxu0 0
        %2086 = vmatpush1.bf16.msra.mxu0 %v2080
        %2087 = vmatprep.subr.bf16.mxu0 0
        %2088 = vmatpush1.bf16.msra.mxu0 0
        %2089 = vmatprep.subr.bf16.mxu0 0
        %2090 = vmatpush1.bf16.msra.mxu0 0
        %2091 = vmatprep.subr.bf16.mxu0 0
        %2092 = vmatpush1.bf16.msra.mxu0 0
        %2093 = vmatprep.subr.bf16.mxu0 0
        %2094 = vmatpush1.bf16.msra.mxu0 0
        %2095 = vmatprep.subr.bf16.mxu0 0
        %2096 = vmatpush1.bf16.msra.mxu0 0
        %2097 = vmatprep.subr.bf16.mxu0 0
        %2098 = vmatpush1.bf16.msra.mxu0 0
        %2099 = vmatprep.subr.bf16.mxu0 0
        %2100 = vmatpush1.bf16.msra.mxu0 0
        %2101 = vmatprep.subr.bf16.mxu0 0
        %2102 = vmatpush1.bf16.msra.mxu0 0
        %2103 = vmatprep.subr.bf16.mxu0 0
        %2104 = vmatpush1.bf16.msra.mxu0 0
        %2105 = vmatprep.subr.bf16.mxu0 0
        %2106 = vmatpush1.bf16.msra.mxu0 0
        %2107 = vmatprep.subr.bf16.mxu0 0
        %2108 = vmatpush1.bf16.msra.mxu0 0
        %2109 = vmatprep.subr.bf16.mxu0 0
        %2110 = vmatpush1.bf16.msra.mxu0 0
        %2111 = vmatprep.subr.bf16.mxu0 0
        %2112 = vmatpush1.bf16.msra.mxu0 0
        %2113 = vmatprep.subr.bf16.mxu0 0
        %2114 = vmatpush1.bf16.msra.mxu0 0
        %2115 = vmatprep.subr.bf16.mxu0 0
        %2116 = vmatpush1.bf16.msra.mxu0 0
        %2117 = vmatprep.mubr.bf16.mxu0 0
        %2118 = vmatmul.mubr.bf16.gmra.mrb[0].mxu0 %v2083
        %v2119 = vpop.f32.mrb[0].mxu0
        %v2120 = vadd.f32 0.0, %v2119
        %v2121 = vpop.f32.mrb[0].mxu0
        %v2122 = vpop.f32.mrb[0].mxu0
        %v2123 = vadd.f32 0.0, %v2122
        %v2124 = vpop.f32.mrb[0].mxu0
        %2125 = vdwg.mxu0
        %v2126 = vadd.f32 %v2064, %v2120
        %v2127 = vadd.f32 %v2065, %v2123
        %v2128 = vld [vmem:[%s6] sm:$0xff]
        %v2129 = vld [vmem:[%s6 + $0x8] sm:$0xff]
        %2131 = vset.pattern.permute.xlu0 0
        %2132 = vperm.xlu0 %2131, %v2128
        %v2133 = vpop.permute.xlu0 %2132
        %2136 = vset.pattern.permute.xlu0 0
        %2137 = vperm.xlu0 %2136, %v2129
        %v2138 = vpop.permute.xlu0 %2137
        %v2140 = vadd.f32 %v2126, %v2133
        %v2141 = vadd.f32 %v2127, %v2138
        %v2142 = vmax.f32 %v2140, 0.0
        %v2143 = vmax.f32 %v2141, 0.0
        %2144 = vst.msk [vmem:[%s316] sm:$0xff] %vm376, %v2142
        %2145 = vst.msk [vmem:[%s316 + $0x8] sm:$0xff] %vm376, %v2143
        %s2146 = sand.u32 %s188, 1
        %s2147 = scalar_lea.sflag [#allocation5], %s2146
        %s2148 = sand.u32 %s188, 1
        %s2149 = smul.addr %s2148, 16
        %s2150 = scalar_lea.vmem [#allocation8], %s2149
        // Predicated region
        $region57: #{tpu_custom_call.1} parent=47 // pred_check
          %p2151 = pneg %p198
        $region58: #{tpu_custom_call.1} parent=47 // pred_check_branch
          %2153 = sbr.rel (%p2151) target = $region60
        $region59: #{tpu_custom_call.1} parent=47 // pred_region
          %s2155 = ssub.s32 256, 256
          %2156 = vsyncadd %s2147, %s2155
          %s2157 = smul.addr %s23, 2
          %s2158 = smul.addr %s2157, 128
          %s2159 = scalar_lea.hbm %s7, %s2158
          %s2160 = sshll.u32 %s2150, 4
          %s2161 = int_to_ptr.vmem [resolvable:$true] %s2160
          %2166 = dma.vmem_to_hbm [thread:$0]  %s2161, 256, %s2159, %s2147, 128, 128, 8
        $region60: #{tpu_custom_call.1} parent=47 // pred_fallthru
          _
      $region48: #{tpu_custom_call.1} parent=5 // pred_fallthru
        _
      %p2167 = scmp.le.s32.totalorder 2, %s18
      // Predicated region
      $region61: #{tpu_custom_call.1} parent=5 // pred_check
        %p2168 = pneg %p2167
      $region62: #{tpu_custom_call.1} parent=5 // pred_check_branch
        %2170 = sbr.rel (%p2168) target = $region64
      $region63: #{tpu_custom_call.1} parent=5 // pred_region
        %s2171 = ssub.s32 %s18, 2
        // Predicated region
        $region65: #{tpu_custom_call.1} parent=63 // pred_check
          %p2172 = pneg %p204
        $region66: #{tpu_custom_call.1} parent=63 // pred_check_branch
          %2174 = sbr.rel (%p2172) target = $region68
        $region67: #{tpu_custom_call.1} parent=63 // pred_region
          %s2175 = sand.u32 %s189, 1
          %s2176 = scalar_lea.sflag [#allocation5], %s2175
          %s2177 = sand.u32 %s189, 1
          %s2178 = smul.addr %s2177, 16
          %s2179 = scalar_lea.vmem [#allocation8], %s2178
          %2180 = dma.done %s2176, 256
        $region68: #{tpu_custom_call.1} parent=63 // pred_fallthru
          _
      $region64: #{tpu_custom_call.1} parent=5 // pred_fallthru
        _
    $region6: #{tpu_custom_call.1} parent=1 // loop_footer
      %s22 = sadd.s32 1, %s18
    $region7: #{tpu_custom_call.1} parent=1 // loop_footer_branch
      %17 = sbr.rel target = $region3
    $region8: #{tpu_custom_call.1} parent=1 // loop_exit
      _
    %2181 = vsyncpa [#allocation4], 1
    %s2182 = scalar_lea.sflag [#allocation4], 1
    %2183 = vsyncpa %s2182, 1
    %2184 = vsyncpa [#allocation7], 1
    %2185 = vsyncpa [#allocation5], 1
    %s2186 = scalar_lea.sflag [#allocation5], 1
    %2187 = vsyncpa %s2186, 1

</llo_original>
